<compile_context>
chip_gen: v6e
topology: v6e:2x2x1
jax: 0.10.0
libtpu: 0.0.40
codegen_flags: <defaults>
</compile_context>

<pallas_src>
import functools

import jax
import jax.numpy as jnp
from jax.experimental import pallas as pl
from jax.experimental.pallas import tpu as pltpu

LANE = 128
TILE = 256                     # default row/col tile (review: 256-512)
HP = 8                         # heads padded to one sublane group
NEG_INF = -1e30
BIG = 1e30
VMEM_LIMIT = 32 * 1024 * 1024  # explicit, fits v5e/v6e/v7x scoped budgets
XP_RESIDENT_BYTES = 8 * 1024 * 1024  # keep xp VMEM-resident in agg if <= this


def _round_up(x, m):
    return ((x + m - 1) // m) * m


# ----------------------------- projection kernels ---------------------------


def _gat_proj_kernel(x_ref, w_ref, acat_ref, xp_ref, a_ref):
    # xp = x @ W (bf16 operands pre-cast in wrapper, f32 accumulate);
    # both attention-score projections in a single (hd, 16) matmul.
    xp = jnp.dot(x_ref[...], w_ref[...], preferred_element_type=jnp.float32)
    xp_ref[...] = xp.astype(xp_ref.dtype)
    a_ref[...] = jnp.dot(xp, acat_ref[...], preferred_element_type=jnp.float32)


def _gat_proj_fused_kernel(x_ref, wah_ref, bah_ref, w_ref, acat_ref, xp_ref, a_ref):
    # additional_head (Linear + ReLU) fused into the first layer's projection.
    h = jnp.dot(x_ref[...], wah_ref[...], preferred_element_type=jnp.float32)
    h = jnp.maximum(h + bah_ref[...], 0.0)
    xp = jnp.dot(h.astype(jnp.bfloat16), w_ref[...],
                 preferred_element_type=jnp.float32)
    xp_ref[...] = xp.astype(xp_ref.dtype)
    a_ref[...] = jnp.dot(xp, acat_ref[...], preferred_element_type=jnp.float32)


def gat_proj(x, w, a_cat, pre_w=None, pre_b=None, *, tm=TILE):
    n_pad, fin = x.shape
    hd = w.shape[1]
    ac = a_cat.shape[1]          # 2 * HP = 16 (src scores | dst scores)
    grid = (n_pad // tm,)

    x_spec = pl.BlockSpec((tm, fin), lambda i: (i, 0))
    w_spec = pl.BlockSpec((fin, hd), lambda i: (0, 0))
    acat_spec = pl.BlockSpec((hd, ac), lambda i: (0, 0))
    out_shape = (
        jax.ShapeDtypeStruct((n_pad, hd), jnp.bfloat16),   # xp (bf16 halves HBM)
        jax.ShapeDtypeStruct((n_pad, ac), jnp.float32),    # [a_src | a_dst]
    )
    out_specs = (
        pl.BlockSpec((tm, hd), lambda i: (i, 0)),
        pl.BlockSpec((tm, ac), lambda i: (i, 0)),
    )
    cparams = pltpu.CompilerParams(dimension_semantics=("parallel",),
                                   vmem_limit_bytes=VMEM_LIMIT)
    if pre_w is None:
        return pl.pallas_call(
            _gat_proj_kernel, grid=grid,
            in_specs=[x_spec, w_spec, acat_spec],
            out_specs=out_specs, out_shape=out_shape,
            compiler_params=cparams,
        )(x, w, a_cat)

    pre_dim = pre_w.shape[0]
    return pl.pallas_call(
        _gat_proj_fused_kernel, grid=grid,
        in_specs=[x_spec,
                  pl.BlockSpec((pre_dim, pre_dim), lambda i: (0, 0)),
                  pl.BlockSpec((1, pre_dim), lambda i: (0, 0)),
                  w_spec, acat_spec],
        out_specs=out_specs, out_shape=out_shape,
        compiler_params=cparams,
    )(x, pre_w, pre_b, w, a_cat)


# --------------------- attention aggregation (flash-style) ------------------


def _gat_agg_kernel(nnz_ref, idx_ref, adj_ref, adst_ref, asrcT_ref, xp_ref, b_ref,
                    o_ref, m_ref, l_ref, acc_ref, *, heads, head_dim, tn,
                    xp_resident):
    i = pl.program_id(0)
    j = pl.program_id(1)

    @pl.when(j == 0)
    def _init():
        m_ref[...] = jnp.full(m_ref.shape, NEG_INF, m_ref.dtype)
        l_ref[...] = jnp.zeros(l_ref.shape, l_ref.dtype)
        acc_ref[...] = jnp.zeros(acc_ref.shape, acc_ref.dtype)

    # Block-sparse skip: only the first nnz[i] grid steps hold nonzero tiles
    # (compacted list in idx_ref); trailing steps repeat the last index so the
    # pipeline elides their DMA and we skip their compute entirely.
    @pl.when(j < nnz_ref[i])
    def _compute():
        maskf = adj_ref[...].astype(jnp.float32)      # 0/1 edge mask  (TM, TN)
        maskbias = (maskf - 1.0) * BIG                # 0 on edges, -1e30 off
        if xp_resident:
            base = pl.multiple_of(idx_ref[i, j] * tn, tn)
        for h in range(heads):
            lo, hi = h * head_dim, (h + 1) * head_dim
            e = adst_ref[:, h:h + 1] + asrcT_ref[h:h + 1, :]      # (TM, TN)
            e = jnp.where(e > 0, e, 0.2 * e) + maskbias           # LeakyReLU+mask
            m_prev = m_ref[:, h:h + 1]                            # (TM, 1)
            m_new = jnp.maximum(m_prev, jnp.max(e, axis=1, keepdims=True))
            alpha = jnp.exp(m_prev - m_new)                       # rescale
            # multiply-by-mask is load-bearing: rows with no edges so far have
            # e ~ m_new ~ -1e30, so exp(e - m_new) alone would contribute 1.0.
            p = jnp.exp(e - m_new) * maskf
            l_ref[:, h:h + 1] = alpha * l_ref[:, h:h + 1] + jnp.sum(
                p, axis=1, keepdims=True)
            if xp_resident:
                xp_h = xp_ref[pl.ds(base, tn), lo:hi]             # (TN, D) bf16
            else:
                xp_h = xp_ref[:, lo:hi]
            acc_ref[:, lo:hi] = alpha * acc_ref[:, lo:hi] + jnp.dot(
                p.astype(jnp.bfloat16), xp_h, preferred_element_type=jnp.float32)
            m_ref[:, h:h + 1] = m_new

    @pl.when(j == pl.num_programs(1) - 1)
    def _finish():
        b = b_ref[...]
        inv = pl.reciprocal(l_ref[...], approx=True)              # EUP, ~free
        for h in range(heads):
            lo, hi = h * head_dim, (h + 1) * head_dim
            o_ref[:, lo:hi] = jnp.maximum(
                acc_ref[:, lo:hi] * inv[:, h:h + 1] + b[:, lo:hi], 0.0
            ).astype(o_ref.dtype)


def gat_agg(nnz, tile_idx, adj, a_dst, a_src_t, xp, bias, *, heads, head_dim,
            tm=TILE, tn=TILE, out_dtype=jnp.bfloat16):
    n_pad = adj.shape[0]
    hd = xp.shape[1]
    hp = a_dst.shape[1]
    n_i, n_j = n_pad // tm, n_pad // tn

    xp_resident = (xp.size * xp.dtype.itemsize) <= XP_RESIDENT_BYTES
    if xp_resident:
        xp_spec = pl.BlockSpec((n_pad, hd), lambda i, j, nnz_r, idx_r: (0, 0))
    else:
        xp_spec = pl.BlockSpec((tn, hd),
                               lambda i, j, nnz_r, idx_r: (idx_r[i, j], 0))

    kernel = functools.partial(_gat_agg_kernel, heads=heads, head_dim=head_dim,
                               tn=tn, xp_resident=xp_resident)
    grid_spec = pltpu.PrefetchScalarGridSpec(
        num_scalar_prefetch=2,
        grid=(n_i, n_j),
        in_specs=[
            pl.BlockSpec((tm, tn), lambda i, j, nnz_r, idx_r: (i, idx_r[i, j])),
            pl.BlockSpec((tm, hp), lambda i, j, nnz_r, idx_r: (i, 0)),      # a_dst
            pl.BlockSpec((hp, tn), lambda i, j, nnz_r, idx_r: (0, idx_r[i, j])),
            xp_spec,                                                        # xp
            pl.BlockSpec((1, hd), lambda i, j, nnz_r, idx_r: (0, 0)),       # bias
        ],
        out_specs=pl.BlockSpec((tm, hd), lambda i, j, nnz_r, idx_r: (i, 0)),
        scratch_shapes=[
            pltpu.VMEM((tm, hp), jnp.float32),   # running max m (heads on lanes)
            pltpu.VMEM((tm, hp), jnp.float32),   # running sum l
            pltpu.VMEM((tm, hd), jnp.float32),   # output accumulator
        ],
    )
    return pl.pallas_call(
        kernel, grid_spec=grid_spec,
        out_shape=jax.ShapeDtypeStruct((n_pad, hd), out_dtype),
        compiler_params=pltpu.CompilerParams(
            dimension_semantics=("parallel", "arbitrary"),
            vmem_limit_bytes=VMEM_LIMIT),
    )(nnz, tile_idx, adj, a_dst, a_src_t, xp, bias)


# ------------------------------ MLP (output_layer) --------------------------


def _mlp_kernel(x_ref, w1_ref, b1_ref, w2_ref, b2_ref, o_ref):
    h = jnp.dot(x_ref[...], w1_ref[...], preferred_element_type=jnp.float32)
    h = jnp.maximum(h + b1_ref[...], 0.0)
    o_ref[...] = jnp.dot(h.astype(jnp.bfloat16), w2_ref[...],
                         preferred_element_type=jnp.float32) + b2_ref[...]


def mlp(x, w1, b1, w2, b2, *, tm=TILE):
    rows, d_in = x.shape
    d_hid = w1.shape[1]
    d_out = w2.shape[1]
    grid = (rows // tm,)
    return pl.pallas_call(
        _mlp_kernel, grid=grid,
        in_specs=[
            pl.BlockSpec((tm, d_in), lambda i: (i, 0)),
            pl.BlockSpec((d_in, d_hid), lambda i: (0, 0)),
            pl.BlockSpec((1, d_hid), lambda i: (0, 0)),
            pl.BlockSpec((d_hid, d_out), lambda i: (0, 0)),
            pl.BlockSpec((1, d_out), lambda i: (0, 0)),
        ],
        out_specs=pl.BlockSpec((tm, d_out), lambda i: (i, 0)),
        out_shape=jax.ShapeDtypeStruct((rows, d_out), jnp.float32),
        compiler_params=pltpu.CompilerParams(
            dimension_semantics=("parallel",),
            vmem_limit_bytes=VMEM_LIMIT),
    )(x, w1, b1, w2, b2)


# ------------------------------ global mean pool -----------------------------


def _mean_pool_kernel(onehot_ref, x_ref, o_ref):
    @pl.when(pl.program_id(0) == 0)
    def _():
        o_ref[...] = jnp.zeros(o_ref.shape, o_ref.dtype)
    o_ref[...] += jnp.dot(onehot_ref[...], x_ref[...].astype(jnp.float32),
                          preferred_element_type=jnp.float32)


def mean_pool(onehot_norm, x, *, tm=TILE):
    g, n_pad = onehot_norm.shape
    d = x.shape[1]
    grid = (n_pad // tm,)
    return pl.pallas_call(
        _mean_pool_kernel, grid=grid,
        in_specs=[
            pl.BlockSpec((g, tm), lambda i: (0, i)),
            pl.BlockSpec((tm, d), lambda i: (i, 0)),
        ],
        out_specs=pl.BlockSpec((g, d), lambda i: (0, 0)),     # resident accumulator
        out_shape=jax.ShapeDtypeStruct((g, d), jnp.float32),
        compiler_params=pltpu.CompilerParams(
            dimension_semantics=("arbitrary",),
            vmem_limit_bytes=VMEM_LIMIT),
    )(onehot_norm, x)


# ------------------------------ parameter setup ------------------------------


def _xavier(key, fan_in, fan_out):
    lim = (6.0 / (fan_in + fan_out)) ** 0.5
    return jax.random.uniform(key, (fan_in, fan_out), jnp.float32, -lim, lim)


def make_gat_params(key, *, x_dim, graph_emb_dim, heads, num_layers, final_dim=768):
    act = graph_emb_dim // heads
    assert heads <= HP
    keys = jax.random.split(key, 4 + num_layers)
    p = {}
    # additional_head: Linear(x_dim, x_dim) + ReLU      (weights pre-cast to bf16)
    p["ah_w"] = _xavier(keys[0], x_dim, x_dim).astype(jnp.bfloat16)
    p["ah_b"] = jnp.zeros((1, x_dim), jnp.float32)
    # output_layer: Linear(g, g), ReLU, Linear(g, 768)
    p["o1_w"] = _xavier(keys[1], graph_emb_dim, graph_emb_dim).astype(jnp.bfloat16)
    p["o1_b"] = jnp.zeros((1, graph_emb_dim), jnp.float32)
    p["o2_w"] = _xavier(keys[2], graph_emb_dim, final_dim).astype(jnp.bfloat16)
    p["o2_b"] = jnp.zeros((1, final_dim), jnp.float32)
    # GATConv layers
    p["convs"] = []
    for i in range(num_layers):
        in_dim = x_dim if i == 0 else graph_emb_dim
        kw, ks, kd = jax.random.split(keys[3 + i], 3)
        w = _xavier(kw, in_dim, heads * act).astype(jnp.bfloat16)
        att_src = _xavier(ks, heads, act)
        att_dst = _xavier(kd, heads, act)
        # combined score matrix (H*D, 16): col h -> att_src[h], col 8+h -> att_dst[h]
        a_cat = jnp.zeros((heads * act, 2 * HP), jnp.float32)
        for h in range(heads):
            a_cat = a_cat.at[h * act:(h + 1) * act, h].set(att_src[h])
            a_cat = a_cat.at[h * act:(h + 1) * act, HP + h].set(att_dst[h])
        bias = jnp.zeros((1, heads * act), jnp.float32)
        p["convs"].append((w, a_cat, bias))
    return p


# --------------------------------- forward ----------------------------------


def gat_forward(params, x, edge_index, batch, edge_attr, *, heads, graph_emb_dim,
                num_layers, num_graphs, tm=TILE):
    del edge_attr  # unused by the reference forward
    act = graph_emb_dim // heads
    # lane-dense layout requirements (module defaults: g=512, heads=4 -> D=128)
    assert x.shape[1] % LANE == 0 and graph_emb_dim % LANE == 0 and act % LANE == 0

    tn = tm
    n = x.shape[0]
    n_pad = _round_up(max(n, tm), tm)

    x_pad = jnp.zeros((n_pad, x.shape[1]), jnp.bfloat16).at[:n].set(
        x.astype(jnp.bfloat16))

    # dense int8 adjacency mask adj[dst, src] with self loops everywhere
    # (GATConv default self loops; padded-row self loops keep softmax finite).
    adj = jnp.zeros((n_pad, n_pad), jnp.int8)
    adj = adj.at[edge_index[1], edge_index[0]].set(1)
    adj = adj.at[jnp.arange(n_pad), jnp.arange(n_pad)].set(1)

    # block-sparsity metadata: per dst-row-tile compacted list of nonzero src tiles
    n_i, n_j = n_pad // tm, n_pad // tn
    tile_has = jnp.zeros((n_i, n_j), jnp.bool_)
    tile_has = tile_has.at[edge_index[1] // tm, edge_index[0] // tn].set(True)
    tile_has = tile_has.at[jnp.arange(n_pad) // tm, jnp.arange(n_pad) // tn].set(True)
    nnz = tile_has.sum(axis=1).astype(jnp.int32)                       # (n_i,)
    key = jnp.where(tile_has, 0, n_j).astype(jnp.int32) + jnp.arange(n_j)[None, :]
    perm = jnp.argsort(key, axis=1).astype(jnp.int32)                  # nonzero first
    pos = jnp.minimum(jnp.arange(n_j)[None, :], nnz[:, None] - 1)
    tile_idx = jnp.take_along_axis(perm, pos, axis=1).astype(jnp.int32)  # (n_i, n_j)

    layer_outs = []
    x_cur = x_pad
    for i in range(num_layers):
        w, a_cat, bias = params["convs"][i]
        if i == 0:  # fuse additional_head into the first projection
            xp, a_both = gat_proj(x_cur, w, a_cat,
                                  pre_w=params["ah_w"], pre_b=params["ah_b"], tm=tm)
        else:
            xp, a_both = gat_proj(x_cur, w, a_cat, tm=tm)
        a_src_t = a_both[:, :HP].T          # (8, n_pad): src scores on lanes
        a_dst = a_both[:, HP:2 * HP]        # (n_pad, 8)
        out_dtype = jnp.float32 if i == num_layers - 1 else jnp.bfloat16
        x_cur = gat_agg(nnz, tile_idx, adj, a_dst, a_src_t, xp, bias,
                        heads=heads, head_dim=act, tm=tm, tn=tn,
                        out_dtype=out_dtype)
        layer_outs.append(x_cur)

    # output_layer applied once over the concatenation of all layer outputs
    mlp_in = jnp.concatenate([xl.astype(jnp.bfloat16) for xl in layer_outs], axis=0)
    emb_all = mlp(mlp_in, params["o1_w"], params["o1_b"],
                  params["o2_w"], params["o2_b"], tm=tm)                # (L*n_pad, 768)
    embeddings_n = emb_all.reshape(num_layers, n_pad, -1)[:, :n, :].transpose(1, 0, 2)

    # global mean pool of the last layer (normalized one-hot -> pure tiled matmul)
    onehot = (batch[None, :] == jnp.arange(num_graphs)[:, None]).astype(jnp.float32)
    counts = jnp.maximum(onehot.sum(axis=1, keepdims=True), 1.0)
    onehot_pad = jnp.zeros((num_graphs, n_pad), jnp.float32).at[:, :n].set(onehot / counts)
    embeddings_g = mean_pool(onehot_pad, layer_outs[-1], tm=tm)         # (G, g)

    return embeddings_g[:, None, :], embeddings_n, None


# ----------------------------------- demo ------------------------------------


if __name__ == "__main__":
    # sizes consistent with the module defaults (graph_emb=512, heads=4, L=3)
    N = 16             # nodes (small)
    X_DIM = 128        # args.x_dim (lane-aligned)
    GRAPH_EMB = 512    # args.graph_emb_dim default -> head_dim = 128 (lane-dense)
    HEADS = 4          # args.GAT_heads default
    NUM_LAYERS = 3     # args.num_layers default
    NUM_GRAPHS = 2

    key = jax.random.PRNGKey(0)
    k_param, k_x = jax.random.split(key)

    params = make_gat_params(k_param, x_dim=X_DIM, graph_emb_dim=GRAPH_EMB,
                             heads=HEADS, num_layers=NUM_LAYERS, final_dim=768)

    x = jax.random.normal(k_x, (N, X_DIM), jnp.float32)

    # two graphs of 8 nodes each; bidirectional ring edges within each graph
    src, dst = [], []
    for g in range(NUM_GRAPHS):
        base = g * 8
        for i in range(8):
            a, b = base + i, base + (i + 1) % 8
            src += [a, b]
            dst += [b, a]
    edge_index = jnp.array([src, dst], dtype=jnp.int32)                # (2, 32)
    batch = jnp.repeat(jnp.arange(NUM_GRAPHS, dtype=jnp.int32), 8)     # (16,)
    edge_attr = jnp.zeros((edge_index.shape[1], 4), jnp.float32)       # unused

    emb_g, emb_n, _ = gat_forward(
        params, x, edge_index, batch, edge_attr,
        heads=HEADS, graph_emb_dim=GRAPH_EMB,
        num_layers=NUM_LAYERS, num_graphs=NUM_GRAPHS)

    jax.block_until_ready((emb_g, emb_n))
    assert emb_g.shape == (NUM_GRAPHS, 1, GRAPH_EMB)
    assert emb_n.shape == (N, NUM_LAYERS, 768)
    assert bool(jnp.all(jnp.isfinite(emb_g))) and bool(jnp.all(jnp.isfinite(emb_n)))
    print("KERNEL_OK")
</pallas_src>

<mosaic_0001>
module attributes {stable_mosaic.version = 11 : i64} {
  func.func @_gat_proj_fused_kernel(%arg0: i32, %arg1: memref<256x128xbf16, #tpu.memory_space<vmem>>, %arg2: memref<128x128xbf16, #tpu.memory_space<vmem>>, %arg3: memref<1x128xf32, #tpu.memory_space<vmem>>, %arg4: memref<128x512xbf16, #tpu.memory_space<vmem>>, %arg5: memref<512x16xf32, #tpu.memory_space<vmem>>, %arg6: memref<256x512xbf16, #tpu.memory_space<vmem>>, %arg7: memref<256x16xf32, #tpu.memory_space<vmem>>) attributes {dimension_semantics = [#tpu.dimension_semantics<parallel>], iteration_bounds = array<i64: 1>, scalar_prefetch = 0 : i64, scratch_operands = 0 : i64, tpu.core_type = #tpu.core_type<tc>, window_params = [{transform_indices = @transform_0, window_bounds = array<i64: 256, 128>}, {pipeline_mode = #tpu.pipeline_mode<synchronous>, transform_indices = @transform_1, window_bounds = array<i64: 128, 128>}, {pipeline_mode = #tpu.pipeline_mode<synchronous>, transform_indices = @transform_2, window_bounds = array<i64: 1, 128>}, {pipeline_mode = #tpu.pipeline_mode<synchronous>, transform_indices = @transform_3, window_bounds = array<i64: 128, 512>}, {pipeline_mode = #tpu.pipeline_mode<synchronous>, transform_indices = @transform_4, window_bounds = array<i64: 512, 16>}, {transform_indices = @transform_5, window_bounds = array<i64: 256, 512>}, {transform_indices = @transform_6, window_bounds = array<i64: 256, 16>}]} {
    %c0 = arith.constant 0 : index
    %c0_0 = arith.constant 0 : index
    %0 = vector.load %arg1[%c0, %c0_0] : memref<256x128xbf16, #tpu.memory_space<vmem>>, vector<256x128xbf16>
    %c0_1 = arith.constant 0 : index
    %c0_2 = arith.constant 0 : index
    %1 = vector.load %arg2[%c0_1, %c0_2] : memref<128x128xbf16, #tpu.memory_space<vmem>>, vector<128x128xbf16>
    %cst = arith.constant dense<0.000000e+00> : vector<256x128xf32>
    %2 = tpu.matmul %0, %1, %cst {dimension_numbers = #tpu.dot_dimension_numbers<[1], [0], [0], [1], [0, 0, 1, 1], [], []>} : vector<256x128xbf16>, vector<128x128xbf16>, vector<256x128xf32> -> vector<256x128xf32>
    %c0_3 = arith.constant 0 : index
    %c0_4 = arith.constant 0 : index
    %3 = vector.load %arg3[%c0_3, %c0_4] : memref<1x128xf32, #tpu.memory_space<vmem>>, vector<1x128xf32>
    %4 = vector.broadcast %3 : vector<1x128xf32> to vector<256x128xf32>
    %5 = arith.addf %2, %4 : vector<256x128xf32>
    %cst_5 = arith.constant 0.000000e+00 : f32
    %6 = vector.broadcast %cst_5 : f32 to vector<256x128xf32>
    %7 = arith.maximumf %5, %6 : vector<256x128xf32>
    %8 = arith.truncf %7 : vector<256x128xf32> to vector<256x128xbf16>
    %c0_6 = arith.constant 0 : index
    %c0_7 = arith.constant 0 : index
    %9 = vector.load %arg4[%c0_6, %c0_7] : memref<128x512xbf16, #tpu.memory_space<vmem>>, vector<128x512xbf16>
    %cst_8 = arith.constant dense<0.000000e+00> : vector<256x512xf32>
    %10 = tpu.matmul %8, %9, %cst_8 {dimension_numbers = #tpu.dot_dimension_numbers<[1], [0], [0], [1], [0, 0, 1, 1], [], []>} : vector<256x128xbf16>, vector<128x512xbf16>, vector<256x512xf32> -> vector<256x512xf32>
    %11 = arith.truncf %10 : vector<256x512xf32> to vector<256x512xbf16>
    %c0_9 = arith.constant 0 : index
    %c0_10 = arith.constant 0 : index
    %12 = vector.load %arg6[%c0_9, %c0_10] : memref<256x512xbf16, #tpu.memory_space<vmem>>, vector<256x512xbf16>
    tpu.vector_store %arg6[%c0_9, %c0_10], %11 {strides = array<i32>} : memref<256x512xbf16, #tpu.memory_space<vmem>>, vector<256x512xbf16>,
    %c0_11 = arith.constant 0 : index
    %c0_12 = arith.constant 0 : index
    %13 = vector.load %arg5[%c0_11, %c0_12] : memref<512x16xf32, #tpu.memory_space<vmem>>, vector<512x16xf32>
    %cst_13 = arith.constant dense<0.000000e+00> : vector<256x16xf32>
    %14 = tpu.matmul %10, %13, %cst_13 {dimension_numbers = #tpu.dot_dimension_numbers<[1], [0], [0], [1], [0, 0, 1, 1], [], []>} : vector<256x512xf32>, vector<512x16xf32>, vector<256x16xf32> -> vector<256x16xf32>
    %c0_14 = arith.constant 0 : index
    %c0_15 = arith.constant 0 : index
    %15 = vector.load %arg7[%c0_14, %c0_15] : memref<256x16xf32, #tpu.memory_space<vmem>>, vector<256x16xf32>
    tpu.vector_store %arg7[%c0_14, %c0_15], %14 {strides = array<i32>} : memref<256x16xf32, #tpu.memory_space<vmem>>, vector<256x16xf32>,
    return
  }
  func.func @transform_0(%arg0: i32) -> (i32, i32) {
    %c0_i32 = arith.constant 0 : i32
    %c0_i32_0 = arith.constant 0 : i32
    return %arg0, %c0_i32 : i32, i32
  }
  func.func @transform_1(%arg0: i32) -> (i32, i32) {
    %c0_i32 = arith.constant 0 : i32
    %c0_i32_0 = arith.constant 0 : i32
    %c0_i32_1 = arith.constant 0 : i32
    return %c0_i32, %c0_i32_0 : i32, i32
  }
  func.func @transform_2(%arg0: i32) -> (i32, i32) {
    %c0_i32 = arith.constant 0 : i32
    %c0_i32_0 = arith.constant 0 : i32
    %c0_i32_1 = arith.constant 0 : i32
    return %c0_i32, %c0_i32_0 : i32, i32
  }
  func.func @transform_3(%arg0: i32) -> (i32, i32) {
    %c0_i32 = arith.constant 0 : i32
    %c0_i32_0 = arith.constant 0 : i32
    %c0_i32_1 = arith.constant 0 : i32
    return %c0_i32, %c0_i32_0 : i32, i32
  }
  func.func @transform_4(%arg0: i32) -> (i32, i32) {
    %c0_i32 = arith.constant 0 : i32
    %c0_i32_0 = arith.constant 0 : i32
    %c0_i32_1 = arith.constant 0 : i32
    return %c0_i32, %c0_i32_0 : i32, i32
  }
  func.func @transform_5(%arg0: i32) -> (i32, i32) {
    %c0_i32 = arith.constant 0 : i32
    %c0_i32_0 = arith.constant 0 : i32
    return %arg0, %c0_i32 : i32, i32
  }
  func.func @transform_6(%arg0: i32) -> (i32, i32) {
    %c0_i32 = arith.constant 0 : i32
    %c0_i32_0 = arith.constant 0 : i32
    return %arg0, %c0_i32 : i32, i32
  }
}

</mosaic_0001>

<llo_original>
// kernel: tpu_custom_call.1
$region0: #{tpu_custom_call.1}
  #allocation0 [shape = 'u32[]', space=smem, size = 0x4, offset = 0x4, fixed_abs, tag = 'smem constant byte address 0x4 - core index']
  #allocation1 [shape = 'u32[144,128]{1,0:T(1,128)}', space=vmem, size = 0x12000, scoped, tag = 'internal scratch']
  %s0 = inlined_call_operand.vmem [shape: bf16[256,128], index: 0, kind: input, shape index: {}]
  %s1 = inlined_call_operand.vmem [shape: bf16[128,128], index: 1, kind: input, shape index: {}]
  %s2 = inlined_call_operand.vmem [shape: f32[1,128], index: 2, kind: input, shape index: {}]
  %s3 = inlined_call_operand.vmem [shape: bf16[128,512], index: 3, kind: input, shape index: {}]
  %s4 = inlined_call_operand.vmem [shape: f32[512,16], index: 4, kind: input, shape index: {}]
  %s5 = inlined_call_operand.hbm [shape: bf16[256,512], index: 5, kind: output, shape index: {0}]
  %s6 = inlined_call_operand.vmem [shape: f32[256,16], index: 6, kind: output, shape index: {1}]
  %7 = xla_tuple %s5, %s6
  %s8 = sld [smem:[#allocation0]]
  $region38: #{tpu_custom_call.1} parent=0
    _
  %s10 = ssub.s32 1, %s8
  %s11 = scalar_select 0, %s10, %s8
  $region1: #{tpu_custom_call.1} parent=0
    #allocation2 [shape = 'u8[262144]{0}', space=vmem, size = 0x40000, scoped, tag = 'output window, operand 0, single buffered']
    #allocation3 [shape = 's32[1]{0}', space=sflag, size = 0x4, scoped, tag = 'scoped memory for tpu_custom_call.1']
    %12 = vsyncpa [#allocation3], 0
    // Predicated region
    $region2: #{tpu_custom_call.1} parent=1 // pred_check
      _
    $region3: #{tpu_custom_call.1} parent=1 // pred_check_branch
      %14 = sbr.rel (0) target = $region5
    $region4: #{tpu_custom_call.1} parent=1 // pred_region
      _
    $region5: #{tpu_custom_call.1} parent=1 // pred_fallthru
      _
    // Predicated region
    $region6: #{tpu_custom_call.1} parent=1 // pred_check
      _
    $region7: #{tpu_custom_call.1} parent=1 // pred_check_branch
      %16 = sbr.rel (0) target = $region9
    $region8: #{tpu_custom_call.1} parent=1 // pred_region
      _
    $region9: #{tpu_custom_call.1} parent=1 // pred_fallthru
      _
    // Predicated region
    $region10: #{tpu_custom_call.1} parent=1 // pred_check
      _
    $region11: #{tpu_custom_call.1} parent=1 // pred_check_branch
      %18 = sbr.rel (0) target = $region13
    $region12: #{tpu_custom_call.1} parent=1 // pred_region
      _
    $region13: #{tpu_custom_call.1} parent=1 // pred_fallthru
      _
    // Predicated region
    $region14: #{tpu_custom_call.1} parent=1 // pred_check
      _
    $region15: #{tpu_custom_call.1} parent=1 // pred_check_branch
      %20 = sbr.rel (0) target = $region17
    $region16: #{tpu_custom_call.1} parent=1 // pred_region
      _
    $region17: #{tpu_custom_call.1} parent=1 // pred_fallthru
      _
    // Predicated region
    $region18: #{tpu_custom_call.1} parent=1 // pred_check
      _
    $region19: #{tpu_custom_call.1} parent=1 // pred_check_branch
      %22 = sbr.rel (0) target = $region21
    $region20: #{tpu_custom_call.1} parent=1 // pred_region
      _
    $region21: #{tpu_custom_call.1} parent=1 // pred_fallthru
      _
    %v24 = vld [vmem:[%s0] sm:$0xf]
    %v25 = vld [vmem:[%s0 + $0x4] sm:$0xf]
    %v26 = vld [vmem:[%s0 + $0x8] sm:$0xf]
    %v27 = vld [vmem:[%s0 + $0xc] sm:$0xf]
    %v28 = vld [vmem:[%s0 + $0x10] sm:$0xf]
    %v29 = vld [vmem:[%s0 + $0x14] sm:$0xf]
    %v30 = vld [vmem:[%s0 + $0x18] sm:$0xf]
    %v31 = vld [vmem:[%s0 + $0x1c] sm:$0xf]
    %v32 = vld [vmem:[%s0 + $0x20] sm:$0xf]
    %v33 = vld [vmem:[%s0 + $0x24] sm:$0xf]
    %v34 = vld [vmem:[%s0 + $0x28] sm:$0xf]
    %v35 = vld [vmem:[%s0 + $0x2c] sm:$0xf]
    %v36 = vld [vmem:[%s0 + $0x30] sm:$0xf]
    %v37 = vld [vmem:[%s0 + $0x34] sm:$0xf]
    %v38 = vld [vmem:[%s0 + $0x38] sm:$0xf]
    %v39 = vld [vmem:[%s0 + $0x3c] sm:$0xf]
    %v40 = vld [vmem:[%s0 + $0x40] sm:$0xf]
    %v41 = vld [vmem:[%s0 + $0x44] sm:$0xf]
    %v42 = vld [vmem:[%s0 + $0x48] sm:$0xf]
    %v43 = vld [vmem:[%s0 + $0x4c] sm:$0xf]
    %v44 = vld [vmem:[%s0 + $0x50] sm:$0xf]
    %v45 = vld [vmem:[%s0 + $0x54] sm:$0xf]
    %v46 = vld [vmem:[%s0 + $0x58] sm:$0xf]
    %v47 = vld [vmem:[%s0 + $0x5c] sm:$0xf]
    %v48 = vld [vmem:[%s0 + $0x60] sm:$0xf]
    %v49 = vld [vmem:[%s0 + $0x64] sm:$0xf]
    %v50 = vld [vmem:[%s0 + $0x68] sm:$0xf]
    %v51 = vld [vmem:[%s0 + $0x6c] sm:$0xf]
    %v52 = vld [vmem:[%s0 + $0x70] sm:$0xf]
    %v53 = vld [vmem:[%s0 + $0x74] sm:$0xf]
    %v54 = vld [vmem:[%s0 + $0x78] sm:$0xf]
    %v55 = vld [vmem:[%s0 + $0x7c] sm:$0xf]
    %v56 = vld [vmem:[%s1] sm:$0xf]
    %v57 = vld [vmem:[%s1 + $0x4] sm:$0xf]
    %v58 = vld [vmem:[%s1 + $0x8] sm:$0xf]
    %v59 = vld [vmem:[%s1 + $0xc] sm:$0xf]
    %v60 = vld [vmem:[%s1 + $0x10] sm:$0xf]
    %v61 = vld [vmem:[%s1 + $0x14] sm:$0xf]
    %v62 = vld [vmem:[%s1 + $0x18] sm:$0xf]
    %v63 = vld [vmem:[%s1 + $0x1c] sm:$0xf]
    %v64 = vld [vmem:[%s1 + $0x20] sm:$0xf]
    %v65 = vld [vmem:[%s1 + $0x24] sm:$0xf]
    %v66 = vld [vmem:[%s1 + $0x28] sm:$0xf]
    %v67 = vld [vmem:[%s1 + $0x2c] sm:$0xf]
    %v68 = vld [vmem:[%s1 + $0x30] sm:$0xf]
    %v69 = vld [vmem:[%s1 + $0x34] sm:$0xf]
    %v70 = vld [vmem:[%s1 + $0x38] sm:$0xf]
    %v71 = vld [vmem:[%s1 + $0x3c] sm:$0xf]
    %v72 = vld [vmem:[%s2] sm:$0x1]
    %v74 = vlaneseq
    %v75 = vshrl.u32 %v74, 7
    %v76 = vsub.s32 0, %v75
    %v77 = vrot.slane %v72, %v76
    %v111 = vunpack.c.l.b16 %v24
    %v112 = vunpack.c.l.b16 %v25
    %v113 = vunpack.c.l.b16 %v26
    %v114 = vunpack.c.l.b16 %v27
    %v115 = vunpack.c.l.b16 %v28
    %v116 = vunpack.c.l.b16 %v29
    %v117 = vunpack.c.l.b16 %v30
    %v118 = vunpack.c.l.b16 %v31
    %v119 = vunpack.c.l.b16 %v32
    %v120 = vunpack.c.l.b16 %v33
    %v121 = vunpack.c.l.b16 %v34
    %v122 = vunpack.c.l.b16 %v35
    %v123 = vunpack.c.l.b16 %v36
    %v124 = vunpack.c.l.b16 %v37
    %v125 = vunpack.c.l.b16 %v38
    %v126 = vunpack.c.l.b16 %v39
    %v127 = vunpack.c.l.b16 %v40
    %v128 = vunpack.c.l.b16 %v41
    %v129 = vunpack.c.l.b16 %v42
    %v130 = vunpack.c.l.b16 %v43
    %v131 = vunpack.c.l.b16 %v44
    %v132 = vunpack.c.l.b16 %v45
    %v133 = vunpack.c.l.b16 %v46
    %v134 = vunpack.c.l.b16 %v47
    %v135 = vunpack.c.l.b16 %v48
    %v136 = vunpack.c.l.b16 %v49
    %v137 = vunpack.c.l.b16 %v50
    %v138 = vunpack.c.l.b16 %v51
    %v139 = vunpack.c.l.b16 %v52
    %v140 = vunpack.c.l.b16 %v53
    %v141 = vunpack.c.l.b16 %v54
    %v142 = vunpack.c.l.b16 %v55
    %v143 = vpack.c.b16 %v112, %v111
    %v144 = vpack.c.b16 %v114, %v113
    %v145 = vpack.c.b16 %v116, %v115
    %v146 = vpack.c.b16 %v118, %v117
    %v147 = vpack.c.b16 %v120, %v119
    %v148 = vpack.c.b16 %v122, %v121
    %v149 = vpack.c.b16 %v124, %v123
    %v150 = vpack.c.b16 %v126, %v125
    %v151 = vpack.c.b16 %v128, %v127
    %v152 = vpack.c.b16 %v130, %v129
    %v153 = vpack.c.b16 %v132, %v131
    %v154 = vpack.c.b16 %v134, %v133
    %v155 = vpack.c.b16 %v136, %v135
    %v156 = vpack.c.b16 %v138, %v137
    %v157 = vpack.c.b16 %v140, %v139
    %v158 = vpack.c.b16 %v142, %v141
    %v191 = vunpack.c.l.b16 %v56
    %v192 = vunpack.c.l.b16 %v57
    %v193 = vunpack.c.l.b16 %v58
    %v194 = vunpack.c.l.b16 %v59
    %v195 = vunpack.c.l.b16 %v60
    %v196 = vunpack.c.l.b16 %v61
    %v197 = vunpack.c.l.b16 %v62
    %v198 = vunpack.c.l.b16 %v63
    %v199 = vunpack.c.l.b16 %v64
    %v200 = vunpack.c.l.b16 %v65
    %v201 = vunpack.c.l.b16 %v66
    %v202 = vunpack.c.l.b16 %v67
    %v203 = vunpack.c.l.b16 %v68
    %v204 = vunpack.c.l.b16 %v69
    %v205 = vunpack.c.l.b16 %v70
    %v206 = vunpack.c.l.b16 %v71
    %v207 = vpack.c.b16 %v192, %v191
    %v208 = vpack.c.b16 %v194, %v193
    %v209 = vpack.c.b16 %v196, %v195
    %v210 = vpack.c.b16 %v198, %v197
    %v211 = vpack.c.b16 %v200, %v199
    %v212 = vpack.c.b16 %v202, %v201
    %v213 = vpack.c.b16 %v204, %v203
    %v214 = vpack.c.b16 %v206, %v205
    %223 = vmatprep.subr.bf16.mxu0 0
    %224 = vmatpush1.bf16.msra.mxu0 %v214
    %225 = vmatprep.subr.bf16.mxu0 0
    %226 = vmatpush1.bf16.msra.mxu0 %v213
    %227 = vmatprep.subr.bf16.mxu0 0
    %228 = vmatpush1.bf16.msra.mxu0 %v212
    %229 = vmatprep.subr.bf16.mxu0 0
    %230 = vmatpush1.bf16.msra.mxu0 %v211
    %231 = vmatprep.subr.bf16.mxu0 0
    %232 = vmatpush1.bf16.msra.mxu0 %v210
    %233 = vmatprep.subr.bf16.mxu0 0
    %234 = vmatpush1.bf16.msra.mxu0 %v209
    %235 = vmatprep.subr.bf16.mxu0 0
    %236 = vmatpush1.bf16.msra.mxu0 %v208
    %237 = vmatprep.subr.bf16.mxu0 0
    %238 = vmatpush1.bf16.msra.mxu0 %v207
    %239 = vmatprep.subr.bf16.mxu0 0
    %240 = vmatpush2.bf16.msra.mxu0 0
    %241 = vmatprep.subr.bf16.mxu0 0
    %242 = vmatpush2.bf16.msra.mxu0 0
    %243 = vmatprep.subr.bf16.mxu0 0
    %244 = vmatpush2.bf16.msra.mxu0 0
    %245 = vmatprep.subr.bf16.mxu0 0
    %246 = vmatpush2.bf16.msra.mxu0 0
    %247 = vmatprep.subr.bf16.mxu0 0
    %248 = vmatpush2.bf16.msra.mxu0 0
    %249 = vmatprep.subr.bf16.mxu0 0
    %250 = vmatpush2.bf16.msra.mxu0 0
    %251 = vmatprep.subr.bf16.mxu0 0
    %252 = vmatpush2.bf16.msra.mxu0 0
    %253 = vmatprep.subr.bf16.mxu0 0
    %254 = vmatpush2.bf16.msra.mxu0 0
    %255 = vmatprep.mubr.bf16.mxu0 0
    %256 = vmatmul.mubr.bf16.gmra.mxu0 %v143
    %v257 = vpop.f32.mrf.mxu0
    %v258 = vadd.f32 %v77, %v257
    %v259 = vpop.f32.mrf.mxu0
    %v260 = vpop.f32.mrf.mxu0
    %v261 = vadd.f32 %v77, %v260
    %v262 = vpop.f32.mrf.mxu0
    %263 = vmatprep.mubr.bf16.mxu0 0
    %264 = vmatmul.mubr.bf16.gmra.mxu0 %v144
    %v265 = vpop.f32.mrf.mxu0
    %v266 = vadd.f32 %v77, %v265
    %v267 = vpop.f32.mrf.mxu0
    %v268 = vpop.f32.mrf.mxu0
    %v269 = vadd.f32 %v77, %v268
    %v270 = vpop.f32.mrf.mxu0
    %271 = vmatprep.mubr.bf16.mxu0 0
    %272 = vmatmul.mubr.bf16.gmra.mxu0 %v145
    %v273 = vpop.f32.mrf.mxu0
    %v274 = vadd.f32 %v77, %v273
    %v275 = vpop.f32.mrf.mxu0
    %v276 = vpop.f32.mrf.mxu0
    %v277 = vadd.f32 %v77, %v276
    %v278 = vpop.f32.mrf.mxu0
    %279 = vmatprep.mubr.bf16.mxu0 0
    %280 = vmatmul.mubr.bf16.gmra.mxu0 %v146
    %v281 = vpop.f32.mrf.mxu0
    %v282 = vadd.f32 %v77, %v281
    %v283 = vpop.f32.mrf.mxu0
    %v284 = vpop.f32.mrf.mxu0
    %v285 = vadd.f32 %v77, %v284
    %v286 = vpop.f32.mrf.mxu0
    %287 = vmatprep.mubr.bf16.mxu0 0
    %288 = vmatmul.mubr.bf16.gmra.mxu0 %v147
    %v289 = vpop.f32.mrf.mxu0
    %v290 = vadd.f32 %v77, %v289
    %v291 = vpop.f32.mrf.mxu0
    %v292 = vpop.f32.mrf.mxu0
    %v293 = vadd.f32 %v77, %v292
    %v294 = vpop.f32.mrf.mxu0
    %295 = vmatprep.mubr.bf16.mxu0 0
    %296 = vmatmul.mubr.bf16.gmra.mxu0 %v148
    %v297 = vpop.f32.mrf.mxu0
    %v298 = vadd.f32 %v77, %v297
    %v299 = vpop.f32.mrf.mxu0
    %v300 = vpop.f32.mrf.mxu0
    %v301 = vadd.f32 %v77, %v300
    %v302 = vpop.f32.mrf.mxu0
    %303 = vmatprep.mubr.bf16.mxu0 0
    %304 = vmatmul.mubr.bf16.gmra.mxu0 %v149
    %v305 = vpop.f32.mrf.mxu0
    %v306 = vadd.f32 %v77, %v305
    %v307 = vpop.f32.mrf.mxu0
    %v308 = vpop.f32.mrf.mxu0
    %v309 = vadd.f32 %v77, %v308
    %v310 = vpop.f32.mrf.mxu0
    %311 = vmatprep.mubr.bf16.mxu0 0
    %312 = vmatmul.mubr.bf16.gmra.mxu0 %v150
    %v313 = vpop.f32.mrf.mxu0
    %v314 = vadd.f32 %v77, %v313
    %v315 = vpop.f32.mrf.mxu0
    %v316 = vpop.f32.mrf.mxu0
    %v317 = vadd.f32 %v77, %v316
    %v318 = vpop.f32.mrf.mxu0
    %319 = vmatprep.mubr.bf16.mxu0 0
    %320 = vmatmul.mubr.bf16.gmra.mxu0 %v151
    %v321 = vpop.f32.mrf.mxu0
    %v322 = vadd.f32 %v77, %v321
    %v323 = vpop.f32.mrf.mxu0
    %v324 = vpop.f32.mrf.mxu0
    %v325 = vadd.f32 %v77, %v324
    %v326 = vpop.f32.mrf.mxu0
    %327 = vmatprep.mubr.bf16.mxu0 0
    %328 = vmatmul.mubr.bf16.gmra.mxu0 %v152
    %v329 = vpop.f32.mrf.mxu0
    %v330 = vadd.f32 %v77, %v329
    %v331 = vpop.f32.mrf.mxu0
    %v332 = vpop.f32.mrf.mxu0
    %v333 = vadd.f32 %v77, %v332
    %v334 = vpop.f32.mrf.mxu0
    %335 = vmatprep.mubr.bf16.mxu0 0
    %336 = vmatmul.mubr.bf16.gmra.mxu0 %v153
    %v337 = vpop.f32.mrf.mxu0
    %v338 = vadd.f32 %v77, %v337
    %v339 = vpop.f32.mrf.mxu0
    %v340 = vpop.f32.mrf.mxu0
    %v341 = vadd.f32 %v77, %v340
    %v342 = vpop.f32.mrf.mxu0
    %343 = vmatprep.mubr.bf16.mxu0 0
    %344 = vmatmul.mubr.bf16.gmra.mxu0 %v154
    %v345 = vpop.f32.mrf.mxu0
    %v346 = vadd.f32 %v77, %v345
    %v347 = vpop.f32.mrf.mxu0
    %v348 = vpop.f32.mrf.mxu0
    %v349 = vadd.f32 %v77, %v348
    %v350 = vpop.f32.mrf.mxu0
    %351 = vmatprep.mubr.bf16.mxu0 0
    %352 = vmatmul.mubr.bf16.gmra.mxu0 %v155
    %v353 = vpop.f32.mrf.mxu0
    %v354 = vadd.f32 %v77, %v353
    %v355 = vpop.f32.mrf.mxu0
    %v356 = vpop.f32.mrf.mxu0
    %v357 = vadd.f32 %v77, %v356
    %v358 = vpop.f32.mrf.mxu0
    %359 = vmatprep.mubr.bf16.mxu0 0
    %360 = vmatmul.mubr.bf16.gmra.mxu0 %v156
    %v361 = vpop.f32.mrf.mxu0
    %v362 = vadd.f32 %v77, %v361
    %v363 = vpop.f32.mrf.mxu0
    %v364 = vpop.f32.mrf.mxu0
    %v365 = vadd.f32 %v77, %v364
    %v366 = vpop.f32.mrf.mxu0
    %367 = vmatprep.mubr.bf16.mxu0 0
    %368 = vmatmul.mubr.bf16.gmra.mxu0 %v157
    %v369 = vpop.f32.mrf.mxu0
    %v370 = vadd.f32 %v77, %v369
    %v371 = vpop.f32.mrf.mxu0
    %v372 = vpop.f32.mrf.mxu0
    %v373 = vadd.f32 %v77, %v372
    %v374 = vpop.f32.mrf.mxu0
    %375 = vmatprep.mubr.bf16.mxu0 0
    %376 = vmatmul.mubr.bf16.gmra.mxu0 %v158
    %v377 = vpop.f32.mrf.mxu0
    %v378 = vadd.f32 %v77, %v377
    %v379 = vpop.f32.mrf.mxu0
    %v380 = vpop.f32.mrf.mxu0
    %v381 = vadd.f32 %v77, %v380
    %v382 = vpop.f32.mrf.mxu0
    %383 = vdwg.mxu0
    %v384 = vmax.f32 %v258, 0.0
    %v385 = vmax.f32 %v261, 0.0
    %v386 = vmax.f32 %v266, 0.0
    %v387 = vmax.f32 %v269, 0.0
    %v388 = vmax.f32 %v274, 0.0
    %v389 = vmax.f32 %v277, 0.0
    %v390 = vmax.f32 %v282, 0.0
    %v391 = vmax.f32 %v285, 0.0
    %v392 = vmax.f32 %v290, 0.0
    %v393 = vmax.f32 %v293, 0.0
    %v394 = vmax.f32 %v298, 0.0
    %v395 = vmax.f32 %v301, 0.0
    %v396 = vmax.f32 %v306, 0.0
    %v397 = vmax.f32 %v309, 0.0
    %v398 = vmax.f32 %v314, 0.0
    %v399 = vmax.f32 %v317, 0.0
    %v400 = vmax.f32 %v322, 0.0
    %v401 = vmax.f32 %v325, 0.0
    %v402 = vmax.f32 %v330, 0.0
    %v403 = vmax.f32 %v333, 0.0
    %v404 = vmax.f32 %v338, 0.0
    %v405 = vmax.f32 %v341, 0.0
    %v406 = vmax.f32 %v346, 0.0
    %v407 = vmax.f32 %v349, 0.0
    %v408 = vmax.f32 %v354, 0.0
    %v409 = vmax.f32 %v357, 0.0
    %v410 = vmax.f32 %v362, 0.0
    %v411 = vmax.f32 %v365, 0.0
    %v412 = vmax.f32 %v370, 0.0
    %v413 = vmax.f32 %v373, 0.0
    %v414 = vmax.f32 %v378, 0.0
    %v415 = vmax.f32 %v381, 0.0
    %v416 = vpack.c.bf16 %v385, %v384
    %v417 = vpack.c.bf16 %v387, %v386
    %v418 = vpack.c.bf16 %v389, %v388
    %v419 = vpack.c.bf16 %v391, %v390
    %v420 = vpack.c.bf16 %v393, %v392
    %v421 = vpack.c.bf16 %v395, %v394
    %v422 = vpack.c.bf16 %v397, %v396
    %v423 = vpack.c.bf16 %v399, %v398
    %v424 = vpack.c.bf16 %v401, %v400
    %v425 = vpack.c.bf16 %v403, %v402
    %v426 = vpack.c.bf16 %v405, %v404
    %v427 = vpack.c.bf16 %v407, %v406
    %v428 = vpack.c.bf16 %v409, %v408
    %v429 = vpack.c.bf16 %v411, %v410
    %v430 = vpack.c.bf16 %v413, %v412
    %v431 = vpack.c.bf16 %v415, %v414
    %v432 = vld [vmem:[%s3] sm:$0xff]
    %v433 = vld [vmem:[%s3 + $0x8] sm:$0xff]
    %v434 = vld [vmem:[%s3 + $0x10] sm:$0xff]
    %v435 = vld [vmem:[%s3 + $0x18] sm:$0xff]
    %v436 = vld [vmem:[%s3 + $0x20] sm:$0xff]
    %v437 = vld [vmem:[%s3 + $0x28] sm:$0xff]
    %v438 = vld [vmem:[%s3 + $0x30] sm:$0xff]
    %v439 = vld [vmem:[%s3 + $0x38] sm:$0xff]
    %v440 = vld [vmem:[%s3 + $0x40] sm:$0xff]
    %v441 = vld [vmem:[%s3 + $0x48] sm:$0xff]
    %v442 = vld [vmem:[%s3 + $0x50] sm:$0xff]
    %v443 = vld [vmem:[%s3 + $0x58] sm:$0xff]
    %v444 = vld [vmem:[%s3 + $0x60] sm:$0xff]
    %v445 = vld [vmem:[%s3 + $0x68] sm:$0xff]
    %v446 = vld [vmem:[%s3 + $0x70] sm:$0xff]
    %v447 = vld [vmem:[%s3 + $0x78] sm:$0xff]
    %v448 = vld [vmem:[%s3 + $0x80] sm:$0xff]
    %v449 = vld [vmem:[%s3 + $0x88] sm:$0xff]
    %v450 = vld [vmem:[%s3 + $0x90] sm:$0xff]
    %v451 = vld [vmem:[%s3 + $0x98] sm:$0xff]
    %v452 = vld [vmem:[%s3 + $0xa0] sm:$0xff]
    %v453 = vld [vmem:[%s3 + $0xa8] sm:$0xff]
    %v454 = vld [vmem:[%s3 + $0xb0] sm:$0xff]
    %v455 = vld [vmem:[%s3 + $0xb8] sm:$0xff]
    %v456 = vld [vmem:[%s3 + $0xc0] sm:$0xff]
    %v457 = vld [vmem:[%s3 + $0xc8] sm:$0xff]
    %v458 = vld [vmem:[%s3 + $0xd0] sm:$0xff]
    %v459 = vld [vmem:[%s3 + $0xd8] sm:$0xff]
    %v460 = vld [vmem:[%s3 + $0xe0] sm:$0xff]
    %v461 = vld [vmem:[%s3 + $0xe8] sm:$0xff]
    %v462 = vld [vmem:[%s3 + $0xf0] sm:$0xff]
    %v463 = vld [vmem:[%s3 + $0xf8] sm:$0xff]
    %v496 = vunpack.c.l.b16 %v432
    %v497 = vunpack.c.h.b16 %v432
    %v498 = vunpack.c.l.b16 %v433
    %v499 = vunpack.c.h.b16 %v433
    %v500 = vunpack.c.l.b16 %v434
    %v501 = vunpack.c.h.b16 %v434
    %v502 = vunpack.c.l.b16 %v435
    %v503 = vunpack.c.h.b16 %v435
    %v504 = vunpack.c.l.b16 %v436
    %v505 = vunpack.c.h.b16 %v436
    %v506 = vunpack.c.l.b16 %v437
    %v507 = vunpack.c.h.b16 %v437
    %v508 = vunpack.c.l.b16 %v438
    %v509 = vunpack.c.h.b16 %v438
    %v510 = vunpack.c.l.b16 %v439
    %v511 = vunpack.c.h.b16 %v439
    %v512 = vunpack.c.l.b16 %v440
    %v513 = vunpack.c.h.b16 %v440
    %v514 = vunpack.c.l.b16 %v441
    %v515 = vunpack.c.h.b16 %v441
    %v516 = vunpack.c.l.b16 %v442
    %v517 = vunpack.c.h.b16 %v442
    %v518 = vunpack.c.l.b16 %v443
    %v519 = vunpack.c.h.b16 %v443
    %v520 = vunpack.c.l.b16 %v444
    %v521 = vunpack.c.h.b16 %v444
    %v522 = vunpack.c.l.b16 %v445
    %v523 = vunpack.c.h.b16 %v445
    %v524 = vunpack.c.l.b16 %v446
    %v525 = vunpack.c.h.b16 %v446
    %v526 = vunpack.c.l.b16 %v447
    %v527 = vunpack.c.h.b16 %v447
    %v528 = vunpack.c.l.b16 %v448
    %v529 = vunpack.c.h.b16 %v448
    %v530 = vunpack.c.l.b16 %v449
    %v531 = vunpack.c.h.b16 %v449
    %v532 = vunpack.c.l.b16 %v450
    %v533 = vunpack.c.h.b16 %v450
    %v534 = vunpack.c.l.b16 %v451
    %v535 = vunpack.c.h.b16 %v451
    %v536 = vunpack.c.l.b16 %v452
    %v537 = vunpack.c.h.b16 %v452
    %v538 = vunpack.c.l.b16 %v453
    %v539 = vunpack.c.h.b16 %v453
    %v540 = vunpack.c.l.b16 %v454
    %v541 = vunpack.c.h.b16 %v454
    %v542 = vunpack.c.l.b16 %v455
    %v543 = vunpack.c.h.b16 %v455
    %v544 = vunpack.c.l.b16 %v456
    %v545 = vunpack.c.h.b16 %v456
    %v546 = vunpack.c.l.b16 %v457
    %v547 = vunpack.c.h.b16 %v457
    %v548 = vunpack.c.l.b16 %v458
    %v549 = vunpack.c.h.b16 %v458
    %v550 = vunpack.c.l.b16 %v459
    %v551 = vunpack.c.h.b16 %v459
    %v552 = vunpack.c.l.b16 %v460
    %v553 = vunpack.c.h.b16 %v460
    %v554 = vunpack.c.l.b16 %v461
    %v555 = vunpack.c.h.b16 %v461
    %v556 = vunpack.c.l.b16 %v462
    %v557 = vunpack.c.h.b16 %v462
    %v558 = vunpack.c.l.b16 %v463
    %v559 = vunpack.c.h.b16 %v463
    %v560 = vpack.c.b16 %v500, %v496
    %v561 = vpack.c.b16 %v501, %v497
    %v562 = vpack.c.b16 %v502, %v498
    %v563 = vpack.c.b16 %v503, %v499
    %v564 = vpack.c.b16 %v508, %v504
    %v565 = vpack.c.b16 %v509, %v505
    %v566 = vpack.c.b16 %v510, %v506
    %v567 = vpack.c.b16 %v511, %v507
    %v568 = vpack.c.b16 %v516, %v512
    %v569 = vpack.c.b16 %v517, %v513
    %v570 = vpack.c.b16 %v518, %v514
    %v571 = vpack.c.b16 %v519, %v515
    %v572 = vpack.c.b16 %v524, %v520
    %v573 = vpack.c.b16 %v525, %v521
    %v574 = vpack.c.b16 %v526, %v522
    %v575 = vpack.c.b16 %v527, %v523
    %v576 = vpack.c.b16 %v532, %v528
    %v577 = vpack.c.b16 %v533, %v529
    %v578 = vpack.c.b16 %v534, %v530
    %v579 = vpack.c.b16 %v535, %v531
    %v580 = vpack.c.b16 %v540, %v536
    %v581 = vpack.c.b16 %v541, %v537
    %v582 = vpack.c.b16 %v542, %v538
    %v583 = vpack.c.b16 %v543, %v539
    %v584 = vpack.c.b16 %v548, %v544
    %v585 = vpack.c.b16 %v549, %v545
    %v586 = vpack.c.b16 %v550, %v546
    %v587 = vpack.c.b16 %v551, %v547
    %v588 = vpack.c.b16 %v556, %v552
    %v589 = vpack.c.b16 %v557, %v553
    %v590 = vpack.c.b16 %v558, %v554
    %v591 = vpack.c.b16 %v559, %v555
    %624 = vmatprep.subr.bf16.mxu0 %v589
    %625 = vmatpush1.bf16.msra.mxu0 %v588
    %626 = vmatprep.subr.bf16.mxu0 %v585
    %627 = vmatpush1.bf16.msra.mxu0 %v584
    %628 = vmatprep.subr.bf16.mxu0 %v581
    %629 = vmatpush1.bf16.msra.mxu0 %v580
    %630 = vmatprep.subr.bf16.mxu0 %v577
    %631 = vmatpush1.bf16.msra.mxu0 %v576
    %632 = vmatprep.subr.bf16.mxu0 %v573
    %633 = vmatpush1.bf16.msra.mxu0 %v572
    %634 = vmatprep.subr.bf16.mxu0 %v569
    %635 = vmatpush1.bf16.msra.mxu0 %v568
    %636 = vmatprep.subr.bf16.mxu0 %v565
    %637 = vmatpush1.bf16.msra.mxu0 %v564
    %638 = vmatprep.subr.bf16.mxu0 %v561
    %639 = vmatpush1.bf16.msra.mxu0 %v560
    %640 = vmatprep.subr.bf16.mxu0 0
    %641 = vmatpush2.bf16.msra.mxu0 0
    %642 = vmatprep.subr.bf16.mxu0 0
    %643 = vmatpush2.bf16.msra.mxu0 0
    %644 = vmatprep.subr.bf16.mxu0 0
    %645 = vmatpush2.bf16.msra.mxu0 0
    %646 = vmatprep.subr.bf16.mxu0 0
    %647 = vmatpush2.bf16.msra.mxu0 0
    %648 = vmatprep.subr.bf16.mxu0 0
    %649 = vmatpush2.bf16.msra.mxu0 0
    %650 = vmatprep.subr.bf16.mxu0 0
    %651 = vmatpush2.bf16.msra.mxu0 0
    %652 = vmatprep.subr.bf16.mxu0 0
    %653 = vmatpush2.bf16.msra.mxu0 0
    %654 = vmatprep.subr.bf16.mxu0 0
    %655 = vmatpush2.bf16.msra.mxu0 0
    %656 = vmatprep.mubr.bf16.mxu0 0
    %657 = vmatmul.mubr.bf16.gmra.mxu0 %v416
    %v658 = vpop.f32.mrf.mxu0
    %v659 = vadd.f32 0.0, %v658
    %v660 = vpop.f32.mrf.mxu0
    %v661 = vadd.f32 0.0, %v660
    %v662 = vpop.f32.mrf.mxu0
    %v663 = vadd.f32 0.0, %v662
    %v664 = vpop.f32.mrf.mxu0
    %v665 = vadd.f32 0.0, %v664
    %666 = vmatprep.mubr.bf16.mxu0 0
    %667 = vmatmul.mubr.bf16.gmra.mxu0 %v417
    %v668 = vpop.f32.mrf.mxu0
    %v669 = vadd.f32 0.0, %v668
    %v670 = vpop.f32.mrf.mxu0
    %v671 = vadd.f32 0.0, %v670
    %v672 = vpop.f32.mrf.mxu0
    %v673 = vadd.f32 0.0, %v672
    %v674 = vpop.f32.mrf.mxu0
    %v675 = vadd.f32 0.0, %v674
    %676 = vmatprep.mubr.bf16.mxu0 0
    %677 = vmatmul.mubr.bf16.gmra.mxu0 %v418
    %v678 = vpop.f32.mrf.mxu0
    %v679 = vadd.f32 0.0, %v678
    %v680 = vpop.f32.mrf.mxu0
    %v681 = vadd.f32 0.0, %v680
    %v682 = vpop.f32.mrf.mxu0
    %v683 = vadd.f32 0.0, %v682
    %v684 = vpop.f32.mrf.mxu0
    %v685 = vadd.f32 0.0, %v684
    %686 = vmatprep.mubr.bf16.mxu0 0
    %687 = vmatmul.mubr.bf16.gmra.mxu0 %v419
    %v688 = vpop.f32.mrf.mxu0
    %v689 = vadd.f32 0.0, %v688
    %v690 = vpop.f32.mrf.mxu0
    %v691 = vadd.f32 0.0, %v690
    %v692 = vpop.f32.mrf.mxu0
    %v693 = vadd.f32 0.0, %v692
    %v694 = vpop.f32.mrf.mxu0
    %v695 = vadd.f32 0.0, %v694
    %696 = vmatprep.mubr.bf16.mxu0 0
    %697 = vmatmul.mubr.bf16.gmra.mxu0 %v420
    %v698 = vpop.f32.mrf.mxu0
    %v699 = vadd.f32 0.0, %v698
    %v700 = vpop.f32.mrf.mxu0
    %v701 = vadd.f32 0.0, %v700
    %v702 = vpop.f32.mrf.mxu0
    %v703 = vadd.f32 0.0, %v702
    %v704 = vpop.f32.mrf.mxu0
    %v705 = vadd.f32 0.0, %v704
    %706 = vmatprep.mubr.bf16.mxu0 0
    %707 = vmatmul.mubr.bf16.gmra.mxu0 %v421
    %v708 = vpop.f32.mrf.mxu0
    %v709 = vadd.f32 0.0, %v708
    %v710 = vpop.f32.mrf.mxu0
    %v711 = vadd.f32 0.0, %v710
    %v712 = vpop.f32.mrf.mxu0
    %v713 = vadd.f32 0.0, %v712
    %v714 = vpop.f32.mrf.mxu0
    %v715 = vadd.f32 0.0, %v714
    %716 = vmatprep.mubr.bf16.mxu0 0
    %717 = vmatmul.mubr.bf16.gmra.mxu0 %v422
    %v718 = vpop.f32.mrf.mxu0
    %v719 = vadd.f32 0.0, %v718
    %v720 = vpop.f32.mrf.mxu0
    %v721 = vadd.f32 0.0, %v720
    %v722 = vpop.f32.mrf.mxu0
    %v723 = vadd.f32 0.0, %v722
    %v724 = vpop.f32.mrf.mxu0
    %v725 = vadd.f32 0.0, %v724
    %726 = vmatprep.mubr.bf16.mxu0 0
    %727 = vmatmul.mubr.bf16.gmra.mxu0 %v423
    %v728 = vpop.f32.mrf.mxu0
    %v729 = vadd.f32 0.0, %v728
    %v730 = vpop.f32.mrf.mxu0
    %v731 = vadd.f32 0.0, %v730
    %v732 = vpop.f32.mrf.mxu0
    %v733 = vadd.f32 0.0, %v732
    %v734 = vpop.f32.mrf.mxu0
    %v735 = vadd.f32 0.0, %v734
    %736 = vmatprep.mubr.bf16.mxu0 0
    %737 = vmatmul.mubr.bf16.gmra.mxu0 %v424
    %v738 = vpop.f32.mrf.mxu0
    %v739 = vadd.f32 0.0, %v738
    %v740 = vpop.f32.mrf.mxu0
    %v741 = vadd.f32 0.0, %v740
    %v742 = vpop.f32.mrf.mxu0
    %v743 = vadd.f32 0.0, %v742
    %v744 = vpop.f32.mrf.mxu0
    %v745 = vadd.f32 0.0, %v744
    %746 = vmatprep.mubr.bf16.mxu0 0
    %747 = vmatmul.mubr.bf16.gmra.mxu0 %v425
    %v748 = vpop.f32.mrf.mxu0
    %v749 = vadd.f32 0.0, %v748
    %v750 = vpop.f32.mrf.mxu0
    %v751 = vadd.f32 0.0, %v750
    %v752 = vpop.f32.mrf.mxu0
    %v753 = vadd.f32 0.0, %v752
    %v754 = vpop.f32.mrf.mxu0
    %v755 = vadd.f32 0.0, %v754
    %756 = vmatprep.mubr.bf16.mxu0 0
    %757 = vmatmul.mubr.bf16.gmra.mxu0 %v426
    %v758 = vpop.f32.mrf.mxu0
    %v759 = vadd.f32 0.0, %v758
    %v760 = vpop.f32.mrf.mxu0
    %v761 = vadd.f32 0.0, %v760
    %v762 = vpop.f32.mrf.mxu0
    %v763 = vadd.f32 0.0, %v762
    %v764 = vpop.f32.mrf.mxu0
    %v765 = vadd.f32 0.0, %v764
    %766 = vmatprep.mubr.bf16.mxu0 0
    %767 = vmatmul.mubr.bf16.gmra.mxu0 %v427
    %v768 = vpop.f32.mrf.mxu0
    %v769 = vadd.f32 0.0, %v768
    %v770 = vpop.f32.mrf.mxu0
    %v771 = vadd.f32 0.0, %v770
    %v772 = vpop.f32.mrf.mxu0
    %v773 = vadd.f32 0.0, %v772
    %v774 = vpop.f32.mrf.mxu0
    %v775 = vadd.f32 0.0, %v774
    %776 = vmatprep.mubr.bf16.mxu0 0
    %777 = vmatmul.mubr.bf16.gmra.mxu0 %v428
    %v778 = vpop.f32.mrf.mxu0
    %v779 = vadd.f32 0.0, %v778
    %v780 = vpop.f32.mrf.mxu0
    %v781 = vadd.f32 0.0, %v780
    %v782 = vpop.f32.mrf.mxu0
    %v783 = vadd.f32 0.0, %v782
    %v784 = vpop.f32.mrf.mxu0
    %v785 = vadd.f32 0.0, %v784
    %786 = vmatprep.mubr.bf16.mxu0 0
    %787 = vmatmul.mubr.bf16.gmra.mxu0 %v429
    %v788 = vpop.f32.mrf.mxu0
    %v789 = vadd.f32 0.0, %v788
    %v790 = vpop.f32.mrf.mxu0
    %v791 = vadd.f32 0.0, %v790
    %v792 = vpop.f32.mrf.mxu0
    %v793 = vadd.f32 0.0, %v792
    %v794 = vpop.f32.mrf.mxu0
    %v795 = vadd.f32 0.0, %v794
    %796 = vmatprep.mubr.bf16.mxu0 0
    %797 = vmatmul.mubr.bf16.gmra.mxu0 %v430
    %v798 = vpop.f32.mrf.mxu0
    %v799 = vadd.f32 0.0, %v798
    %v800 = vpop.f32.mrf.mxu0
    %v801 = vadd.f32 0.0, %v800
    %v802 = vpop.f32.mrf.mxu0
    %v803 = vadd.f32 0.0, %v802
    %v804 = vpop.f32.mrf.mxu0
    %v805 = vadd.f32 0.0, %v804
    %806 = vmatprep.mubr.bf16.mxu0 0
    %807 = vmatmul.mubr.bf16.gmra.mxu0 %v431
    %v808 = vpop.f32.mrf.mxu0
    %v809 = vadd.f32 0.0, %v808
    %v810 = vpop.f32.mrf.mxu0
    %v811 = vadd.f32 0.0, %v810
    %v812 = vpop.f32.mrf.mxu0
    %v813 = vadd.f32 0.0, %v812
    %v814 = vpop.f32.mrf.mxu0
    %v815 = vadd.f32 0.0, %v814
    %816 = vdwg.mxu0
    %817 = vmatprep.subr.bf16.mxu0 %v591
    %818 = vmatpush1.bf16.msra.mxu0 %v590
    %819 = vmatprep.subr.bf16.mxu0 %v587
    %820 = vmatpush1.bf16.msra.mxu0 %v586
    %821 = vmatprep.subr.bf16.mxu0 %v583
    %822 = vmatpush1.bf16.msra.mxu0 %v582
    %823 = vmatprep.subr.bf16.mxu0 %v579
    %824 = vmatpush1.bf16.msra.mxu0 %v578
    %825 = vmatprep.subr.bf16.mxu0 %v575
    %826 = vmatpush1.bf16.msra.mxu0 %v574
    %827 = vmatprep.subr.bf16.mxu0 %v571
    %828 = vmatpush1.bf16.msra.mxu0 %v570
    %829 = vmatprep.subr.bf16.mxu0 %v567
    %830 = vmatpush1.bf16.msra.mxu0 %v566
    %831 = vmatprep.subr.bf16.mxu0 %v563
    %832 = vmatpush1.bf16.msra.mxu0 %v562
    %833 = vmatprep.subr.bf16.mxu0 0
    %834 = vmatpush2.bf16.msra.mxu0 0
    %835 = vmatprep.subr.bf16.mxu0 0
    %836 = vmatpush2.bf16.msra.mxu0 0
    %837 = vmatprep.subr.bf16.mxu0 0
    %838 = vmatpush2.bf16.msra.mxu0 0
    %839 = vmatprep.subr.bf16.mxu0 0
    %840 = vmatpush2.bf16.msra.mxu0 0
    %841 = vmatprep.subr.bf16.mxu0 0
    %842 = vmatpush2.bf16.msra.mxu0 0
    %843 = vmatprep.subr.bf16.mxu0 0
    %844 = vmatpush2.bf16.msra.mxu0 0
    %845 = vmatprep.subr.bf16.mxu0 0
    %846 = vmatpush2.bf16.msra.mxu0 0
    %847 = vmatprep.subr.bf16.mxu0 0
    %848 = vmatpush2.bf16.msra.mxu0 0
    %849 = vmatprep.mubr.bf16.mxu0 0
    %850 = vmatmul.mubr.bf16.gmra.mxu0 %v416
    %v851 = vpop.f32.mrf.mxu0
    %v852 = vadd.f32 0.0, %v851
    %v853 = vpop.f32.mrf.mxu0
    %v854 = vadd.f32 0.0, %v853
    %v855 = vpop.f32.mrf.mxu0
    %v856 = vadd.f32 0.0, %v855
    %v857 = vpop.f32.mrf.mxu0
    %v858 = vadd.f32 0.0, %v857
    %859 = vmatprep.mubr.bf16.mxu0 0
    %860 = vmatmul.mubr.bf16.gmra.mxu0 %v417
    %v861 = vpop.f32.mrf.mxu0
    %v862 = vadd.f32 0.0, %v861
    %v863 = vpop.f32.mrf.mxu0
    %v864 = vadd.f32 0.0, %v863
    %v865 = vpop.f32.mrf.mxu0
    %v866 = vadd.f32 0.0, %v865
    %v867 = vpop.f32.mrf.mxu0
    %v868 = vadd.f32 0.0, %v867
    %869 = vmatprep.mubr.bf16.mxu0 0
    %870 = vmatmul.mubr.bf16.gmra.mxu0 %v418
    %v871 = vpop.f32.mrf.mxu0
    %v872 = vadd.f32 0.0, %v871
    %v873 = vpop.f32.mrf.mxu0
    %v874 = vadd.f32 0.0, %v873
    %v875 = vpop.f32.mrf.mxu0
    %v876 = vadd.f32 0.0, %v875
    %v877 = vpop.f32.mrf.mxu0
    %v878 = vadd.f32 0.0, %v877
    %879 = vmatprep.mubr.bf16.mxu0 0
    %880 = vmatmul.mubr.bf16.gmra.mxu0 %v419
    %v881 = vpop.f32.mrf.mxu0
    %v882 = vadd.f32 0.0, %v881
    %v883 = vpop.f32.mrf.mxu0
    %v884 = vadd.f32 0.0, %v883
    %v885 = vpop.f32.mrf.mxu0
    %v886 = vadd.f32 0.0, %v885
    %v887 = vpop.f32.mrf.mxu0
    %v888 = vadd.f32 0.0, %v887
    %889 = vmatprep.mubr.bf16.mxu0 0
    %890 = vmatmul.mubr.bf16.gmra.mxu0 %v420
    %v891 = vpop.f32.mrf.mxu0
    %v892 = vadd.f32 0.0, %v891
    %v893 = vpop.f32.mrf.mxu0
    %v894 = vadd.f32 0.0, %v893
    %v895 = vpop.f32.mrf.mxu0
    %v896 = vadd.f32 0.0, %v895
    %v897 = vpop.f32.mrf.mxu0
    %v898 = vadd.f32 0.0, %v897
    %899 = vmatprep.mubr.bf16.mxu0 0
    %900 = vmatmul.mubr.bf16.gmra.mxu0 %v421
    %v901 = vpop.f32.mrf.mxu0
    %v902 = vadd.f32 0.0, %v901
    %v903 = vpop.f32.mrf.mxu0
    %v904 = vadd.f32 0.0, %v903
    %v905 = vpop.f32.mrf.mxu0
    %v906 = vadd.f32 0.0, %v905
    %v907 = vpop.f32.mrf.mxu0
    %v908 = vadd.f32 0.0, %v907
    %909 = vmatprep.mubr.bf16.mxu0 0
    %910 = vmatmul.mubr.bf16.gmra.mxu0 %v422
    %v911 = vpop.f32.mrf.mxu0
    %v912 = vadd.f32 0.0, %v911
    %v913 = vpop.f32.mrf.mxu0
    %v914 = vadd.f32 0.0, %v913
    %v915 = vpop.f32.mrf.mxu0
    %v916 = vadd.f32 0.0, %v915
    %v917 = vpop.f32.mrf.mxu0
    %v918 = vadd.f32 0.0, %v917
    %919 = vmatprep.mubr.bf16.mxu0 0
    %920 = vmatmul.mubr.bf16.gmra.mxu0 %v423
    %v921 = vpop.f32.mrf.mxu0
    %v922 = vadd.f32 0.0, %v921
    %v923 = vpop.f32.mrf.mxu0
    %v924 = vadd.f32 0.0, %v923
    %v925 = vpop.f32.mrf.mxu0
    %v926 = vadd.f32 0.0, %v925
    %v927 = vpop.f32.mrf.mxu0
    %v928 = vadd.f32 0.0, %v927
    %929 = vmatprep.mubr.bf16.mxu0 0
    %930 = vmatmul.mubr.bf16.gmra.mxu0 %v424
    %v931 = vpop.f32.mrf.mxu0
    %v932 = vadd.f32 0.0, %v931
    %v933 = vpop.f32.mrf.mxu0
    %v934 = vadd.f32 0.0, %v933
    %v935 = vpop.f32.mrf.mxu0
    %v936 = vadd.f32 0.0, %v935
    %v937 = vpop.f32.mrf.mxu0
    %v938 = vadd.f32 0.0, %v937
    %939 = vmatprep.mubr.bf16.mxu0 0
    %940 = vmatmul.mubr.bf16.gmra.mxu0 %v425
    %v941 = vpop.f32.mrf.mxu0
    %v942 = vadd.f32 0.0, %v941
    %v943 = vpop.f32.mrf.mxu0
    %v944 = vadd.f32 0.0, %v943
    %v945 = vpop.f32.mrf.mxu0
    %v946 = vadd.f32 0.0, %v945
    %v947 = vpop.f32.mrf.mxu0
    %v948 = vadd.f32 0.0, %v947
    %949 = vmatprep.mubr.bf16.mxu0 0
    %950 = vmatmul.mubr.bf16.gmra.mxu0 %v426
    %v951 = vpop.f32.mrf.mxu0
    %v952 = vadd.f32 0.0, %v951
    %v953 = vpop.f32.mrf.mxu0
    %v954 = vadd.f32 0.0, %v953
    %v955 = vpop.f32.mrf.mxu0
    %v956 = vadd.f32 0.0, %v955
    %v957 = vpop.f32.mrf.mxu0
    %v958 = vadd.f32 0.0, %v957
    %959 = vmatprep.mubr.bf16.mxu0 0
    %960 = vmatmul.mubr.bf16.gmra.mxu0 %v427
    %v961 = vpop.f32.mrf.mxu0
    %v962 = vadd.f32 0.0, %v961
    %v963 = vpop.f32.mrf.mxu0
    %v964 = vadd.f32 0.0, %v963
    %v965 = vpop.f32.mrf.mxu0
    %v966 = vadd.f32 0.0, %v965
    %v967 = vpop.f32.mrf.mxu0
    %v968 = vadd.f32 0.0, %v967
    %969 = vmatprep.mubr.bf16.mxu0 0
    %970 = vmatmul.mubr.bf16.gmra.mxu0 %v428
    %v971 = vpop.f32.mrf.mxu0
    %v972 = vadd.f32 0.0, %v971
    %v973 = vpop.f32.mrf.mxu0
    %v974 = vadd.f32 0.0, %v973
    %v975 = vpop.f32.mrf.mxu0
    %v976 = vadd.f32 0.0, %v975
    %v977 = vpop.f32.mrf.mxu0
    %v978 = vadd.f32 0.0, %v977
    %979 = vmatprep.mubr.bf16.mxu0 0
    %980 = vmatmul.mubr.bf16.gmra.mxu0 %v429
    %v981 = vpop.f32.mrf.mxu0
    %v982 = vadd.f32 0.0, %v981
    %v983 = vpop.f32.mrf.mxu0
    %v984 = vadd.f32 0.0, %v983
    %v985 = vpop.f32.mrf.mxu0
    %v986 = vadd.f32 0.0, %v985
    %v987 = vpop.f32.mrf.mxu0
    %v988 = vadd.f32 0.0, %v987
    %989 = vmatprep.mubr.bf16.mxu0 0
    %990 = vmatmul.mubr.bf16.gmra.mxu0 %v430
    %v991 = vpop.f32.mrf.mxu0
    %v992 = vadd.f32 0.0, %v991
    %v993 = vpop.f32.mrf.mxu0
    %v994 = vadd.f32 0.0, %v993
    %v995 = vpop.f32.mrf.mxu0
    %v996 = vadd.f32 0.0, %v995
    %v997 = vpop.f32.mrf.mxu0
    %v998 = vadd.f32 0.0, %v997
    %999 = vmatprep.mubr.bf16.mxu0 0
    %1000 = vmatmul.mubr.bf16.gmra.mxu0 %v431
    %v1001 = vpop.f32.mrf.mxu0
    %v1002 = vadd.f32 0.0, %v1001
    %v1003 = vpop.f32.mrf.mxu0
    %v1004 = vadd.f32 0.0, %v1003
    %v1005 = vpop.f32.mrf.mxu0
    %v1006 = vadd.f32 0.0, %v1005
    %v1007 = vpop.f32.mrf.mxu0
    %v1008 = vadd.f32 0.0, %v1007
    %1009 = vdwg.mxu0
    %v1010 = vpack.c.bf16 %v663, %v659
    %v1011 = vpack.c.bf16 %v665, %v661
    %v1012 = vpack.c.bf16 %v856, %v852
    %v1013 = vpack.c.bf16 %v858, %v854
    %v1014 = vpack.c.bf16 %v673, %v669
    %v1015 = vpack.c.bf16 %v675, %v671
    %v1016 = vpack.c.bf16 %v866, %v862
    %v1017 = vpack.c.bf16 %v868, %v864
    %v1018 = vpack.c.bf16 %v683, %v679
    %v1019 = vpack.c.bf16 %v685, %v681
    %v1020 = vpack.c.bf16 %v876, %v872
    %v1021 = vpack.c.bf16 %v878, %v874
    %v1022 = vpack.c.bf16 %v693, %v689
    %v1023 = vpack.c.bf16 %v695, %v691
    %v1024 = vpack.c.bf16 %v886, %v882
    %v1025 = vpack.c.bf16 %v888, %v884
    %v1026 = vpack.c.bf16 %v703, %v699
    %v1027 = vpack.c.bf16 %v705, %v701
    %v1028 = vpack.c.bf16 %v896, %v892
    %v1029 = vpack.c.bf16 %v898, %v894
    %v1030 = vpack.c.bf16 %v713, %v709
    %v1031 = vpack.c.bf16 %v715, %v711
    %v1032 = vpack.c.bf16 %v906, %v902
    %v1033 = vpack.c.bf16 %v908, %v904
    %v1034 = vpack.c.bf16 %v723, %v719
    %v1035 = vpack.c.bf16 %v725, %v721
    %v1036 = vpack.c.bf16 %v916, %v912
    %v1037 = vpack.c.bf16 %v918, %v914
    %v1038 = vpack.c.bf16 %v733, %v729
    %v1039 = vpack.c.bf16 %v735, %v731
    %v1040 = vpack.c.bf16 %v926, %v922
    %v1041 = vpack.c.bf16 %v928, %v924
    %v1042 = vpack.c.bf16 %v743, %v739
    %v1043 = vpack.c.bf16 %v745, %v741
    %v1044 = vpack.c.bf16 %v936, %v932
    %v1045 = vpack.c.bf16 %v938, %v934
    %v1046 = vpack.c.bf16 %v753, %v749
    %v1047 = vpack.c.bf16 %v755, %v751
    %v1048 = vpack.c.bf16 %v946, %v942
    %v1049 = vpack.c.bf16 %v948, %v944
    %v1050 = vpack.c.bf16 %v763, %v759
    %v1051 = vpack.c.bf16 %v765, %v761
    %v1052 = vpack.c.bf16 %v956, %v952
    %v1053 = vpack.c.bf16 %v958, %v954
    %v1054 = vpack.c.bf16 %v773, %v769
    %v1055 = vpack.c.bf16 %v775, %v771
    %v1056 = vpack.c.bf16 %v966, %v962
    %v1057 = vpack.c.bf16 %v968, %v964
    %v1058 = vpack.c.bf16 %v783, %v779
    %v1059 = vpack.c.bf16 %v785, %v781
    %v1060 = vpack.c.bf16 %v976, %v972
    %v1061 = vpack.c.bf16 %v978, %v974
    %v1062 = vpack.c.bf16 %v793, %v789
    %v1063 = vpack.c.bf16 %v795, %v791
    %v1064 = vpack.c.bf16 %v986, %v982
    %v1065 = vpack.c.bf16 %v988, %v984
    %v1066 = vpack.c.bf16 %v803, %v799
    %v1067 = vpack.c.bf16 %v805, %v801
    %v1068 = vpack.c.bf16 %v996, %v992
    %v1069 = vpack.c.bf16 %v998, %v994
    %v1070 = vpack.c.bf16 %v813, %v809
    %v1071 = vpack.c.bf16 %v815, %v811
    %v1072 = vpack.c.bf16 %v1006, %v1002
    %v1073 = vpack.c.bf16 %v1008, %v1004
    %v1138 = vunpack.c.l.b16 %v1010
    %v1139 = vunpack.c.l.b16 %v1011
    %v1140 = vunpack.c.l.b16 %v1012
    %v1141 = vunpack.c.l.b16 %v1013
    %v1142 = vunpack.c.h.b16 %v1010
    %v1143 = vunpack.c.h.b16 %v1011
    %v1144 = vunpack.c.h.b16 %v1012
    %v1145 = vunpack.c.h.b16 %v1013
    %v1146 = vunpack.c.l.b16 %v1014
    %v1147 = vunpack.c.l.b16 %v1015
    %v1148 = vunpack.c.l.b16 %v1016
    %v1149 = vunpack.c.l.b16 %v1017
    %v1150 = vunpack.c.h.b16 %v1014
    %v1151 = vunpack.c.h.b16 %v1015
    %v1152 = vunpack.c.h.b16 %v1016
    %v1153 = vunpack.c.h.b16 %v1017
    %v1154 = vunpack.c.l.b16 %v1018
    %v1155 = vunpack.c.l.b16 %v1019
    %v1156 = vunpack.c.l.b16 %v1020
    %v1157 = vunpack.c.l.b16 %v1021
    %v1158 = vunpack.c.h.b16 %v1018
    %v1159 = vunpack.c.h.b16 %v1019
    %v1160 = vunpack.c.h.b16 %v1020
    %v1161 = vunpack.c.h.b16 %v1021
    %v1162 = vunpack.c.l.b16 %v1022
    %v1163 = vunpack.c.l.b16 %v1023
    %v1164 = vunpack.c.l.b16 %v1024
    %v1165 = vunpack.c.l.b16 %v1025
    %v1166 = vunpack.c.h.b16 %v1022
    %v1167 = vunpack.c.h.b16 %v1023
    %v1168 = vunpack.c.h.b16 %v1024
    %v1169 = vunpack.c.h.b16 %v1025
    %v1170 = vunpack.c.l.b16 %v1026
    %v1171 = vunpack.c.l.b16 %v1027
    %v1172 = vunpack.c.l.b16 %v1028
    %v1173 = vunpack.c.l.b16 %v1029
    %v1174 = vunpack.c.h.b16 %v1026
    %v1175 = vunpack.c.h.b16 %v1027
    %v1176 = vunpack.c.h.b16 %v1028
    %v1177 = vunpack.c.h.b16 %v1029
    %v1178 = vunpack.c.l.b16 %v1030
    %v1179 = vunpack.c.l.b16 %v1031
    %v1180 = vunpack.c.l.b16 %v1032
    %v1181 = vunpack.c.l.b16 %v1033
    %v1182 = vunpack.c.h.b16 %v1030
    %v1183 = vunpack.c.h.b16 %v1031
    %v1184 = vunpack.c.h.b16 %v1032
    %v1185 = vunpack.c.h.b16 %v1033
    %v1186 = vunpack.c.l.b16 %v1034
    %v1187 = vunpack.c.l.b16 %v1035
    %v1188 = vunpack.c.l.b16 %v1036
    %v1189 = vunpack.c.l.b16 %v1037
    %v1190 = vunpack.c.h.b16 %v1034
    %v1191 = vunpack.c.h.b16 %v1035
    %v1192 = vunpack.c.h.b16 %v1036
    %v1193 = vunpack.c.h.b16 %v1037
    %v1194 = vunpack.c.l.b16 %v1038
    %v1195 = vunpack.c.l.b16 %v1039
    %v1196 = vunpack.c.l.b16 %v1040
    %v1197 = vunpack.c.l.b16 %v1041
    %v1198 = vunpack.c.h.b16 %v1038
    %v1199 = vunpack.c.h.b16 %v1039
    %v1200 = vunpack.c.h.b16 %v1040
    %v1201 = vunpack.c.h.b16 %v1041
    %v1202 = vunpack.c.l.b16 %v1042
    %v1203 = vunpack.c.l.b16 %v1043
    %v1204 = vunpack.c.l.b16 %v1044
    %v1205 = vunpack.c.l.b16 %v1045
    %v1206 = vunpack.c.h.b16 %v1042
    %v1207 = vunpack.c.h.b16 %v1043
    %v1208 = vunpack.c.h.b16 %v1044
    %v1209 = vunpack.c.h.b16 %v1045
    %v1210 = vunpack.c.l.b16 %v1046
    %v1211 = vunpack.c.l.b16 %v1047
    %v1212 = vunpack.c.l.b16 %v1048
    %v1213 = vunpack.c.l.b16 %v1049
    %v1214 = vunpack.c.h.b16 %v1046
    %v1215 = vunpack.c.h.b16 %v1047
    %v1216 = vunpack.c.h.b16 %v1048
    %v1217 = vunpack.c.h.b16 %v1049
    %v1218 = vunpack.c.l.b16 %v1050
    %v1219 = vunpack.c.l.b16 %v1051
    %v1220 = vunpack.c.l.b16 %v1052
    %v1221 = vunpack.c.l.b16 %v1053
    %v1222 = vunpack.c.h.b16 %v1050
    %v1223 = vunpack.c.h.b16 %v1051
    %v1224 = vunpack.c.h.b16 %v1052
    %v1225 = vunpack.c.h.b16 %v1053
    %v1226 = vunpack.c.l.b16 %v1054
    %v1227 = vunpack.c.l.b16 %v1055
    %v1228 = vunpack.c.l.b16 %v1056
    %v1229 = vunpack.c.l.b16 %v1057
    %v1230 = vunpack.c.h.b16 %v1054
    %v1231 = vunpack.c.h.b16 %v1055
    %v1232 = vunpack.c.h.b16 %v1056
    %v1233 = vunpack.c.h.b16 %v1057
    %v1234 = vunpack.c.l.b16 %v1058
    %v1235 = vunpack.c.l.b16 %v1059
    %v1236 = vunpack.c.l.b16 %v1060
    %v1237 = vunpack.c.l.b16 %v1061
    %v1238 = vunpack.c.h.b16 %v1058
    %v1239 = vunpack.c.h.b16 %v1059
    %v1240 = vunpack.c.h.b16 %v1060
    %v1241 = vunpack.c.h.b16 %v1061
    %v1242 = vunpack.c.l.b16 %v1062
    %v1243 = vunpack.c.l.b16 %v1063
    %v1244 = vunpack.c.l.b16 %v1064
    %v1245 = vunpack.c.l.b16 %v1065
    %v1246 = vunpack.c.h.b16 %v1062
    %v1247 = vunpack.c.h.b16 %v1063
    %v1248 = vunpack.c.h.b16 %v1064
    %v1249 = vunpack.c.h.b16 %v1065
    %v1250 = vunpack.c.l.b16 %v1066
    %v1251 = vunpack.c.l.b16 %v1067
    %v1252 = vunpack.c.l.b16 %v1068
    %v1253 = vunpack.c.l.b16 %v1069
    %v1254 = vunpack.c.h.b16 %v1066
    %v1255 = vunpack.c.h.b16 %v1067
    %v1256 = vunpack.c.h.b16 %v1068
    %v1257 = vunpack.c.h.b16 %v1069
    %v1258 = vunpack.c.l.b16 %v1070
    %v1259 = vunpack.c.l.b16 %v1071
    %v1260 = vunpack.c.l.b16 %v1072
    %v1261 = vunpack.c.l.b16 %v1073
    %v1262 = vunpack.c.h.b16 %v1070
    %v1263 = vunpack.c.h.b16 %v1071
    %v1264 = vunpack.c.h.b16 %v1072
    %v1265 = vunpack.c.h.b16 %v1073
    %v1266 = vpack.c.b16 %v1139, %v1138
    %v1267 = vpack.c.b16 %v1141, %v1140
    %v1268 = vpack.c.b16 %v1143, %v1142
    %v1269 = vpack.c.b16 %v1145, %v1144
    %v1270 = vpack.c.b16 %v1147, %v1146
    %v1271 = vpack.c.b16 %v1149, %v1148
    %v1272 = vpack.c.b16 %v1151, %v1150
    %v1273 = vpack.c.b16 %v1153, %v1152
    %v1274 = vpack.c.b16 %v1155, %v1154
    %v1275 = vpack.c.b16 %v1157, %v1156
    %v1276 = vpack.c.b16 %v1159, %v1158
    %v1277 = vpack.c.b16 %v1161, %v1160
    %v1278 = vpack.c.b16 %v1163, %v1162
    %v1279 = vpack.c.b16 %v1165, %v1164
    %v1280 = vpack.c.b16 %v1167, %v1166
    %v1281 = vpack.c.b16 %v1169, %v1168
    %v1282 = vpack.c.b16 %v1171, %v1170
    %v1283 = vpack.c.b16 %v1173, %v1172
    %v1284 = vpack.c.b16 %v1175, %v1174
    %v1285 = vpack.c.b16 %v1177, %v1176
    %v1286 = vpack.c.b16 %v1179, %v1178
    %v1287 = vpack.c.b16 %v1181, %v1180
    %v1288 = vpack.c.b16 %v1183, %v1182
    %v1289 = vpack.c.b16 %v1185, %v1184
    %v1290 = vpack.c.b16 %v1187, %v1186
    %v1291 = vpack.c.b16 %v1189, %v1188
    %v1292 = vpack.c.b16 %v1191, %v1190
    %v1293 = vpack.c.b16 %v1193, %v1192
    %v1294 = vpack.c.b16 %v1195, %v1194
    %v1295 = vpack.c.b16 %v1197, %v1196
    %v1296 = vpack.c.b16 %v1199, %v1198
    %v1297 = vpack.c.b16 %v1201, %v1200
    %v1298 = vpack.c.b16 %v1203, %v1202
    %v1299 = vpack.c.b16 %v1205, %v1204
    %v1300 = vpack.c.b16 %v1207, %v1206
    %v1301 = vpack.c.b16 %v1209, %v1208
    %v1302 = vpack.c.b16 %v1211, %v1210
    %v1303 = vpack.c.b16 %v1213, %v1212
    %v1304 = vpack.c.b16 %v1215, %v1214
    %v1305 = vpack.c.b16 %v1217, %v1216
    %v1306 = vpack.c.b16 %v1219, %v1218
    %v1307 = vpack.c.b16 %v1221, %v1220
    %v1308 = vpack.c.b16 %v1223, %v1222
    %v1309 = vpack.c.b16 %v1225, %v1224
    %v1310 = vpack.c.b16 %v1227, %v1226
    %v1311 = vpack.c.b16 %v1229, %v1228
    %v1312 = vpack.c.b16 %v1231, %v1230
    %v1313 = vpack.c.b16 %v1233, %v1232
    %v1314 = vpack.c.b16 %v1235, %v1234
    %v1315 = vpack.c.b16 %v1237, %v1236
    %v1316 = vpack.c.b16 %v1239, %v1238
    %v1317 = vpack.c.b16 %v1241, %v1240
    %v1318 = vpack.c.b16 %v1243, %v1242
    %v1319 = vpack.c.b16 %v1245, %v1244
    %v1320 = vpack.c.b16 %v1247, %v1246
    %v1321 = vpack.c.b16 %v1249, %v1248
    %v1322 = vpack.c.b16 %v1251, %v1250
    %v1323 = vpack.c.b16 %v1253, %v1252
    %v1324 = vpack.c.b16 %v1255, %v1254
    %v1325 = vpack.c.b16 %v1257, %v1256
    %v1326 = vpack.c.b16 %v1259, %v1258
    %v1327 = vpack.c.b16 %v1261, %v1260
    %v1328 = vpack.c.b16 %v1263, %v1262
    %v1329 = vpack.c.b16 %v1265, %v1264
    %1394 = vst [vmem:[#allocation2] sm:$0xff] %v1266
    %1395 = vst [vmem:[#allocation2 + $0x8] sm:$0xff] %v1267
    %1396 = vst [vmem:[#allocation2 + $0x10] sm:$0xff] %v1268
    %1397 = vst [vmem:[#allocation2 + $0x18] sm:$0xff] %v1269
    %1398 = vst [vmem:[#allocation2 + $0x20] sm:$0xff] %v1270
    %1399 = vst [vmem:[#allocation2 + $0x28] sm:$0xff] %v1271
    %1400 = vst [vmem:[#allocation2 + $0x30] sm:$0xff] %v1272
    %1401 = vst [vmem:[#allocation2 + $0x38] sm:$0xff] %v1273
    %1402 = vst [vmem:[#allocation2 + $0x40] sm:$0xff] %v1274
    %1403 = vst [vmem:[#allocation2 + $0x48] sm:$0xff] %v1275
    %1404 = vst [vmem:[#allocation2 + $0x50] sm:$0xff] %v1276
    %1405 = vst [vmem:[#allocation2 + $0x58] sm:$0xff] %v1277
    %1406 = vst [vmem:[#allocation2 + $0x60] sm:$0xff] %v1278
    %1407 = vst [vmem:[#allocation2 + $0x68] sm:$0xff] %v1279
    %1408 = vst [vmem:[#allocation2 + $0x70] sm:$0xff] %v1280
    %1409 = vst [vmem:[#allocation2 + $0x78] sm:$0xff] %v1281
    %1410 = vst [vmem:[#allocation2 + $0x80] sm:$0xff] %v1282
    %1411 = vst [vmem:[#allocation2 + $0x88] sm:$0xff] %v1283
    %1412 = vst [vmem:[#allocation2 + $0x90] sm:$0xff] %v1284
    %1413 = vst [vmem:[#allocation2 + $0x98] sm:$0xff] %v1285
    %1414 = vst [vmem:[#allocation2 + $0xa0] sm:$0xff] %v1286
    %1415 = vst [vmem:[#allocation2 + $0xa8] sm:$0xff] %v1287
    %1416 = vst [vmem:[#allocation2 + $0xb0] sm:$0xff] %v1288
    %1417 = vst [vmem:[#allocation2 + $0xb8] sm:$0xff] %v1289
    %1418 = vst [vmem:[#allocation2 + $0xc0] sm:$0xff] %v1290
    %1419 = vst [vmem:[#allocation2 + $0xc8] sm:$0xff] %v1291
    %1420 = vst [vmem:[#allocation2 + $0xd0] sm:$0xff] %v1292
    %1421 = vst [vmem:[#allocation2 + $0xd8] sm:$0xff] %v1293
    %1422 = vst [vmem:[#allocation2 + $0xe0] sm:$0xff] %v1294
    %1423 = vst [vmem:[#allocation2 + $0xe8] sm:$0xff] %v1295
    %1424 = vst [vmem:[#allocation2 + $0xf0] sm:$0xff] %v1296
    %1425 = vst [vmem:[#allocation2 + $0xf8] sm:$0xff] %v1297
    %1426 = vst [vmem:[#allocation2 + $0x100] sm:$0xff] %v1298
    %1427 = vst [vmem:[#allocation2 + $0x108] sm:$0xff] %v1299
    %1428 = vst [vmem:[#allocation2 + $0x110] sm:$0xff] %v1300
    %1429 = vst [vmem:[#allocation2 + $0x118] sm:$0xff] %v1301
    %1430 = vst [vmem:[#allocation2 + $0x120] sm:$0xff] %v1302
    %1431 = vst [vmem:[#allocation2 + $0x128] sm:$0xff] %v1303
    %1432 = vst [vmem:[#allocation2 + $0x130] sm:$0xff] %v1304
    %1433 = vst [vmem:[#allocation2 + $0x138] sm:$0xff] %v1305
    %1434 = vst [vmem:[#allocation2 + $0x140] sm:$0xff] %v1306
    %1435 = vst [vmem:[#allocation2 + $0x148] sm:$0xff] %v1307
    %1436 = vst [vmem:[#allocation2 + $0x150] sm:$0xff] %v1308
    %1437 = vst [vmem:[#allocation2 + $0x158] sm:$0xff] %v1309
    %1438 = vst [vmem:[#allocation2 + $0x160] sm:$0xff] %v1310
    %1439 = vst [vmem:[#allocation2 + $0x168] sm:$0xff] %v1311
    %1440 = vst [vmem:[#allocation2 + $0x170] sm:$0xff] %v1312
    %1441 = vst [vmem:[#allocation2 + $0x178] sm:$0xff] %v1313
    %1442 = vst [vmem:[#allocation2 + $0x180] sm:$0xff] %v1314
    %1443 = vst [vmem:[#allocation2 + $0x188] sm:$0xff] %v1315
    %1444 = vst [vmem:[#allocation2 + $0x190] sm:$0xff] %v1316
    %1445 = vst [vmem:[#allocation2 + $0x198] sm:$0xff] %v1317
    %1446 = vst [vmem:[#allocation2 + $0x1a0] sm:$0xff] %v1318
    %1447 = vst [vmem:[#allocation2 + $0x1a8] sm:$0xff] %v1319
    %1448 = vst [vmem:[#allocation2 + $0x1b0] sm:$0xff] %v1320
    %1449 = vst [vmem:[#allocation2 + $0x1b8] sm:$0xff] %v1321
    %1450 = vst [vmem:[#allocation2 + $0x1c0] sm:$0xff] %v1322
    %1451 = vst [vmem:[#allocation2 + $0x1c8] sm:$0xff] %v1323
    %1452 = vst [vmem:[#allocation2 + $0x1d0] sm:$0xff] %v1324
    %1453 = vst [vmem:[#allocation2 + $0x1d8] sm:$0xff] %v1325
    %1454 = vst [vmem:[#allocation2 + $0x1e0] sm:$0xff] %v1326
    %1455 = vst [vmem:[#allocation2 + $0x1e8] sm:$0xff] %v1327
    %1456 = vst [vmem:[#allocation2 + $0x1f0] sm:$0xff] %v1328
    %1457 = vst [vmem:[#allocation2 + $0x1f8] sm:$0xff] %v1329
    %v1458 = vld [vmem:[%s4] sm:$0xff]
    %v1459 = vld [vmem:[%s4 + $0x8] sm:$0xff]
    %v1460 = vld [vmem:[%s4 + $0x10] sm:$0xff]
    %v1461 = vld [vmem:[%s4 + $0x18] sm:$0xff]
    %v1462 = vld [vmem:[%s4 + $0x20] sm:$0xff]
    %v1463 = vld [vmem:[%s4 + $0x28] sm:$0xff]
    %v1464 = vld [vmem:[%s4 + $0x30] sm:$0xff]
    %v1465 = vld [vmem:[%s4 + $0x38] sm:$0xff]
    %v1466 = vld [vmem:[%s4 + $0x40] sm:$0xff]
    %v1467 = vld [vmem:[%s4 + $0x48] sm:$0xff]
    %v1468 = vld [vmem:[%s4 + $0x50] sm:$0xff]
    %v1469 = vld [vmem:[%s4 + $0x58] sm:$0xff]
    %v1470 = vld [vmem:[%s4 + $0x60] sm:$0xff]
    %v1471 = vld [vmem:[%s4 + $0x68] sm:$0xff]
    %v1472 = vld [vmem:[%s4 + $0x70] sm:$0xff]
    %v1473 = vld [vmem:[%s4 + $0x78] sm:$0xff]
    %v1474 = vld [vmem:[%s4 + $0x80] sm:$0xff]
    %v1475 = vld [vmem:[%s4 + $0x88] sm:$0xff]
    %v1476 = vld [vmem:[%s4 + $0x90] sm:$0xff]
    %v1477 = vld [vmem:[%s4 + $0x98] sm:$0xff]
    %v1478 = vld [vmem:[%s4 + $0xa0] sm:$0xff]
    %v1479 = vld [vmem:[%s4 + $0xa8] sm:$0xff]
    %v1480 = vld [vmem:[%s4 + $0xb0] sm:$0xff]
    %v1481 = vld [vmem:[%s4 + $0xb8] sm:$0xff]
    %v1482 = vld [vmem:[%s4 + $0xc0] sm:$0xff]
    %v1483 = vld [vmem:[%s4 + $0xc8] sm:$0xff]
    %v1484 = vld [vmem:[%s4 + $0xd0] sm:$0xff]
    %v1485 = vld [vmem:[%s4 + $0xd8] sm:$0xff]
    %v1486 = vld [vmem:[%s4 + $0xe0] sm:$0xff]
    %v1487 = vld [vmem:[%s4 + $0xe8] sm:$0xff]
    %v1488 = vld [vmem:[%s4 + $0xf0] sm:$0xff]
    %v1489 = vld [vmem:[%s4 + $0xf8] sm:$0xff]
    %v1490 = vld [vmem:[%s4 + $0x100] sm:$0xff]
    %v1491 = vld [vmem:[%s4 + $0x108] sm:$0xff]
    %v1492 = vld [vmem:[%s4 + $0x110] sm:$0xff]
    %v1493 = vld [vmem:[%s4 + $0x118] sm:$0xff]
    %v1494 = vld [vmem:[%s4 + $0x120] sm:$0xff]
    %v1495 = vld [vmem:[%s4 + $0x128] sm:$0xff]
    %v1496 = vld [vmem:[%s4 + $0x130] sm:$0xff]
    %v1497 = vld [vmem:[%s4 + $0x138] sm:$0xff]
    %v1498 = vld [vmem:[%s4 + $0x140] sm:$0xff]
    %v1499 = vld [vmem:[%s4 + $0x148] sm:$0xff]
    %v1500 = vld [vmem:[%s4 + $0x150] sm:$0xff]
    %v1501 = vld [vmem:[%s4 + $0x158] sm:$0xff]
    %v1502 = vld [vmem:[%s4 + $0x160] sm:$0xff]
    %v1503 = vld [vmem:[%s4 + $0x168] sm:$0xff]
    %v1504 = vld [vmem:[%s4 + $0x170] sm:$0xff]
    %v1505 = vld [vmem:[%s4 + $0x178] sm:$0xff]
    %v1506 = vld [vmem:[%s4 + $0x180] sm:$0xff]
    %v1507 = vld [vmem:[%s4 + $0x188] sm:$0xff]
    %v1508 = vld [vmem:[%s4 + $0x190] sm:$0xff]
    %v1509 = vld [vmem:[%s4 + $0x198] sm:$0xff]
    %v1510 = vld [vmem:[%s4 + $0x1a0] sm:$0xff]
    %v1511 = vld [vmem:[%s4 + $0x1a8] sm:$0xff]
    %v1512 = vld [vmem:[%s4 + $0x1b0] sm:$0xff]
    %v1513 = vld [vmem:[%s4 + $0x1b8] sm:$0xff]
    %v1514 = vld [vmem:[%s4 + $0x1c0] sm:$0xff]
    %v1515 = vld [vmem:[%s4 + $0x1c8] sm:$0xff]
    %v1516 = vld [vmem:[%s4 + $0x1d0] sm:$0xff]
    %v1517 = vld [vmem:[%s4 + $0x1d8] sm:$0xff]
    %v1518 = vld [vmem:[%s4 + $0x1e0] sm:$0xff]
    %v1519 = vld [vmem:[%s4 + $0x1e8] sm:$0xff]
    %v1520 = vld [vmem:[%s4 + $0x1f0] sm:$0xff]
    %v1521 = vld [vmem:[%s4 + $0x1f8] sm:$0xff]
    %1522 = vmatprep.subr.mxu0 0.0
    %1523 = vmatpush1.msra.mxu0 %v1473
    %1524 = vmatprep.subr.mxu0 0.0
    %1525 = vmatpush1.msra.mxu0 %v1472
    %1526 = vmatprep.subr.mxu0 0.0
    %1527 = vmatpush1.msra.mxu0 %v1471
    %1528 = vmatprep.subr.mxu0 0.0
    %1529 = vmatpush1.msra.mxu0 %v1470
    %1530 = vmatprep.subr.mxu0 0.0
    %1531 = vmatpush1.msra.mxu0 %v1469
    %1532 = vmatprep.subr.mxu0 0.0
    %1533 = vmatpush1.msra.mxu0 %v1468
    %1534 = vmatprep.subr.mxu0 0.0
    %1535 = vmatpush1.msra.mxu0 %v1467
    %1536 = vmatprep.subr.mxu0 0.0
    %1537 = vmatpush1.msra.mxu0 %v1466
    %1538 = vmatprep.subr.mxu0 0.0
    %1539 = vmatpush1.msra.mxu0 %v1465
    %1540 = vmatprep.subr.mxu0 0.0
    %1541 = vmatpush1.msra.mxu0 %v1464
    %1542 = vmatprep.subr.mxu0 0.0
    %1543 = vmatpush1.msra.mxu0 %v1463
    %1544 = vmatprep.subr.mxu0 0.0
    %1545 = vmatpush1.msra.mxu0 %v1462
    %1546 = vmatprep.subr.mxu0 0.0
    %1547 = vmatpush1.msra.mxu0 %v1461
    %1548 = vmatprep.subr.mxu0 0.0
    %1549 = vmatpush1.msra.mxu0 %v1460
    %1550 = vmatprep.subr.mxu0 0.0
    %1551 = vmatpush1.msra.mxu0 %v1459
    %1552 = vmatprep.subr.mxu0 0.0
    %1553 = vmatpush1.msra.mxu0 %v1458
    %1554 = vmatprep.subr.mxu0 0.0
    %1555 = vmatpush2.msra.mxu0 %v1489
    %1556 = vmatprep.subr.mxu0 0.0
    %1557 = vmatpush2.msra.mxu0 %v1488
    %1558 = vmatprep.subr.mxu0 0.0
    %1559 = vmatpush2.msra.mxu0 %v1487
    %1560 = vmatprep.subr.mxu0 0.0
    %1561 = vmatpush2.msra.mxu0 %v1486
    %1562 = vmatprep.subr.mxu0 0.0
    %1563 = vmatpush2.msra.mxu0 %v1485
    %1564 = vmatprep.subr.mxu0 0.0
    %1565 = vmatpush2.msra.mxu0 %v1484
    %1566 = vmatprep.subr.mxu0 0.0
    %1567 = vmatpush2.msra.mxu0 %v1483
    %1568 = vmatprep.subr.mxu0 0.0
    %1569 = vmatpush2.msra.mxu0 %v1482
    %1570 = vmatprep.subr.mxu0 0.0
    %1571 = vmatpush2.msra.mxu0 %v1481
    %1572 = vmatprep.subr.mxu0 0.0
    %1573 = vmatpush2.msra.mxu0 %v1480
    %1574 = vmatprep.subr.mxu0 0.0
    %1575 = vmatpush2.msra.mxu0 %v1479
    %1576 = vmatprep.subr.mxu0 0.0
    %1577 = vmatpush2.msra.mxu0 %v1478
    %1578 = vmatprep.subr.mxu0 0.0
    %1579 = vmatpush2.msra.mxu0 %v1477
    %1580 = vmatprep.subr.mxu0 0.0
    %1581 = vmatpush2.msra.mxu0 %v1476
    %1582 = vmatprep.subr.mxu0 0.0
    %1583 = vmatpush2.msra.mxu0 %v1475
    %1584 = vmatprep.subr.mxu0 0.0
    %1585 = vmatpush2.msra.mxu0 %v1474
    %1586 = vmatprep.mubr.f32.mxu0 %v661
    %1587 = vmatmul.mubr.f32.gmra.mxu0 %v659
    %v1588 = vpop.f32.mrf.mxu0
    %v1589 = vadd.f32 0.0, %v1588
    %v1590 = vpop.f32.mrf.mxu0
    %1591 = vmatprep.mubr.f32.mxu0 %v665
    %1592 = vmatmul.mubr.f32.gmra.mxu0 %v663
    %v1593 = vpop.f32.mrf.mxu0
    %v1594 = vadd.f32 0.0, %v1593
    %v1595 = vpop.f32.mrf.mxu0
    %1596 = vmatprep.mubr.f32.mxu0 %v671
    %1597 = vmatmul.mubr.f32.gmra.mxu0 %v669
    %v1598 = vpop.f32.mrf.mxu0
    %v1599 = vadd.f32 0.0, %v1598
    %v1600 = vpop.f32.mrf.mxu0
    %1601 = vmatprep.mubr.f32.mxu0 %v675
    %1602 = vmatmul.mubr.f32.gmra.mxu0 %v673
    %v1603 = vpop.f32.mrf.mxu0
    %v1604 = vadd.f32 0.0, %v1603
    %v1605 = vpop.f32.mrf.mxu0
    %1606 = vmatprep.mubr.f32.mxu0 %v681
    %1607 = vmatmul.mubr.f32.gmra.mxu0 %v679
    %v1608 = vpop.f32.mrf.mxu0
    %v1609 = vadd.f32 0.0, %v1608
    %v1610 = vpop.f32.mrf.mxu0
    %1611 = vmatprep.mubr.f32.mxu0 %v685
    %1612 = vmatmul.mubr.f32.gmra.mxu0 %v683
    %v1613 = vpop.f32.mrf.mxu0
    %v1614 = vadd.f32 0.0, %v1613
    %v1615 = vpop.f32.mrf.mxu0
    %1616 = vmatprep.mubr.f32.mxu0 %v691
    %1617 = vmatmul.mubr.f32.gmra.mxu0 %v689
    %v1618 = vpop.f32.mrf.mxu0
    %v1619 = vadd.f32 0.0, %v1618
    %v1620 = vpop.f32.mrf.mxu0
    %1621 = vmatprep.mubr.f32.mxu0 %v695
    %1622 = vmatmul.mubr.f32.gmra.mxu0 %v693
    %v1623 = vpop.f32.mrf.mxu0
    %v1624 = vadd.f32 0.0, %v1623
    %v1625 = vpop.f32.mrf.mxu0
    %1626 = vmatprep.mubr.f32.mxu0 %v701
    %1627 = vmatmul.mubr.f32.gmra.mxu0 %v699
    %v1628 = vpop.f32.mrf.mxu0
    %v1629 = vadd.f32 0.0, %v1628
    %v1630 = vpop.f32.mrf.mxu0
    %1631 = vmatprep.mubr.f32.mxu0 %v705
    %1632 = vmatmul.mubr.f32.gmra.mxu0 %v703
    %v1633 = vpop.f32.mrf.mxu0
    %v1634 = vadd.f32 0.0, %v1633
    %v1635 = vpop.f32.mrf.mxu0
    %1636 = vmatprep.mubr.f32.mxu0 %v711
    %1637 = vmatmul.mubr.f32.gmra.mxu0 %v709
    %v1638 = vpop.f32.mrf.mxu0
    %v1639 = vadd.f32 0.0, %v1638
    %v1640 = vpop.f32.mrf.mxu0
    %1641 = vmatprep.mubr.f32.mxu0 %v715
    %1642 = vmatmul.mubr.f32.gmra.mxu0 %v713
    %v1643 = vpop.f32.mrf.mxu0
    %v1644 = vadd.f32 0.0, %v1643
    %v1645 = vpop.f32.mrf.mxu0
    %1646 = vmatprep.mubr.f32.mxu0 %v721
    %1647 = vmatmul.mubr.f32.gmra.mxu0 %v719
    %v1648 = vpop.f32.mrf.mxu0
    %v1649 = vadd.f32 0.0, %v1648
    %v1650 = vpop.f32.mrf.mxu0
    %1651 = vmatprep.mubr.f32.mxu0 %v725
    %1652 = vmatmul.mubr.f32.gmra.mxu0 %v723
    %v1653 = vpop.f32.mrf.mxu0
    %v1654 = vadd.f32 0.0, %v1653
    %v1655 = vpop.f32.mrf.mxu0
    %1656 = vmatprep.mubr.f32.mxu0 %v731
    %1657 = vmatmul.mubr.f32.gmra.mxu0 %v729
    %v1658 = vpop.f32.mrf.mxu0
    %v1659 = vadd.f32 0.0, %v1658
    %v1660 = vpop.f32.mrf.mxu0
    %1661 = vmatprep.mubr.f32.mxu0 %v735
    %1662 = vmatmul.mubr.f32.gmra.mxu0 %v733
    %v1663 = vpop.f32.mrf.mxu0
    %v1664 = vadd.f32 0.0, %v1663
    %v1665 = vpop.f32.mrf.mxu0
    %1666 = vmatprep.mubr.f32.mxu0 %v741
    %1667 = vmatmul.mubr.f32.gmra.mxu0 %v739
    %v1668 = vpop.f32.mrf.mxu0
    %v1669 = vadd.f32 0.0, %v1668
    %v1670 = vpop.f32.mrf.mxu0
    %1671 = vmatprep.mubr.f32.mxu0 %v745
    %1672 = vmatmul.mubr.f32.gmra.mxu0 %v743
    %v1673 = vpop.f32.mrf.mxu0
    %v1674 = vadd.f32 0.0, %v1673
    %v1675 = vpop.f32.mrf.mxu0
    %1676 = vmatprep.mubr.f32.mxu0 %v751
    %1677 = vmatmul.mubr.f32.gmra.mxu0 %v749
    %v1678 = vpop.f32.mrf.mxu0
    %v1679 = vadd.f32 0.0, %v1678
    %v1680 = vpop.f32.mrf.mxu0
    %1681 = vmatprep.mubr.f32.mxu0 %v755
    %1682 = vmatmul.mubr.f32.gmra.mxu0 %v753
    %v1683 = vpop.f32.mrf.mxu0
    %v1684 = vadd.f32 0.0, %v1683
    %v1685 = vpop.f32.mrf.mxu0
    %1686 = vmatprep.mubr.f32.mxu0 %v761
    %1687 = vmatmul.mubr.f32.gmra.mxu0 %v759
    %v1688 = vpop.f32.mrf.mxu0
    %v1689 = vadd.f32 0.0, %v1688
    %v1690 = vpop.f32.mrf.mxu0
    %1691 = vmatprep.mubr.f32.mxu0 %v765
    %1692 = vmatmul.mubr.f32.gmra.mxu0 %v763
    %v1693 = vpop.f32.mrf.mxu0
    %v1694 = vadd.f32 0.0, %v1693
    %v1695 = vpop.f32.mrf.mxu0
    %1696 = vmatprep.mubr.f32.mxu0 %v771
    %1697 = vmatmul.mubr.f32.gmra.mxu0 %v769
    %v1698 = vpop.f32.mrf.mxu0
    %v1699 = vadd.f32 0.0, %v1698
    %v1700 = vpop.f32.mrf.mxu0
    %1701 = vmatprep.mubr.f32.mxu0 %v775
    %1702 = vmatmul.mubr.f32.gmra.mxu0 %v773
    %v1703 = vpop.f32.mrf.mxu0
    %v1704 = vadd.f32 0.0, %v1703
    %v1705 = vpop.f32.mrf.mxu0
    %1706 = vmatprep.mubr.f32.mxu0 %v781
    %1707 = vmatmul.mubr.f32.gmra.mxu0 %v779
    %v1708 = vpop.f32.mrf.mxu0
    %v1709 = vadd.f32 0.0, %v1708
    %v1710 = vpop.f32.mrf.mxu0
    %1711 = vmatprep.mubr.f32.mxu0 %v785
    %1712 = vmatmul.mubr.f32.gmra.mxu0 %v783
    %v1713 = vpop.f32.mrf.mxu0
    %v1714 = vadd.f32 0.0, %v1713
    %v1715 = vpop.f32.mrf.mxu0
    %1716 = vmatprep.mubr.f32.mxu0 %v791
    %1717 = vmatmul.mubr.f32.gmra.mxu0 %v789
    %v1718 = vpop.f32.mrf.mxu0
    %v1719 = vadd.f32 0.0, %v1718
    %v1720 = vpop.f32.mrf.mxu0
    %1721 = vmatprep.mubr.f32.mxu0 %v795
    %1722 = vmatmul.mubr.f32.gmra.mxu0 %v793
    %v1723 = vpop.f32.mrf.mxu0
    %v1724 = vadd.f32 0.0, %v1723
    %v1725 = vpop.f32.mrf.mxu0
    %1726 = vmatprep.mubr.f32.mxu0 %v801
    %1727 = vmatmul.mubr.f32.gmra.mxu0 %v799
    %v1728 = vpop.f32.mrf.mxu0
    %v1729 = vadd.f32 0.0, %v1728
    %v1730 = vpop.f32.mrf.mxu0
    %1731 = vmatprep.mubr.f32.mxu0 %v805
    %1732 = vmatmul.mubr.f32.gmra.mxu0 %v803
    %v1733 = vpop.f32.mrf.mxu0
    %v1734 = vadd.f32 0.0, %v1733
    %v1735 = vpop.f32.mrf.mxu0
    %1736 = vmatprep.mubr.f32.mxu0 %v811
    %1737 = vmatmul.mubr.f32.gmra.mxu0 %v809
    %v1738 = vpop.f32.mrf.mxu0
    %v1739 = vadd.f32 0.0, %v1738
    %v1740 = vpop.f32.mrf.mxu0
    %1741 = vmatprep.mubr.f32.mxu0 %v815
    %1742 = vmatmul.mubr.f32.gmra.mxu0 %v813
    %v1743 = vpop.f32.mrf.mxu0
    %v1744 = vadd.f32 0.0, %v1743
    %v1745 = vpop.f32.mrf.mxu0
    %1746 = vdwg.mxu0
    %1747 = vmatprep.subr.mxu0 0.0
    %1748 = vmatpush1.msra.mxu0 %v1505
    %1749 = vmatprep.subr.mxu0 0.0
    %1750 = vmatpush1.msra.mxu0 %v1504
    %1751 = vmatprep.subr.mxu0 0.0
    %1752 = vmatpush1.msra.mxu0 %v1503
    %1753 = vmatprep.subr.mxu0 0.0
    %1754 = vmatpush1.msra.mxu0 %v1502
    %1755 = vmatprep.subr.mxu0 0.0
    %1756 = vmatpush1.msra.mxu0 %v1501
    %1757 = vmatprep.subr.mxu0 0.0
    %1758 = vmatpush1.msra.mxu0 %v1500
    %1759 = vmatprep.subr.mxu0 0.0
    %1760 = vmatpush1.msra.mxu0 %v1499
    %1761 = vmatprep.subr.mxu0 0.0
    %1762 = vmatpush1.msra.mxu0 %v1498
    %1763 = vmatprep.subr.mxu0 0.0
    %1764 = vmatpush1.msra.mxu0 %v1497
    %1765 = vmatprep.subr.mxu0 0.0
    %1766 = vmatpush1.msra.mxu0 %v1496
    %1767 = vmatprep.subr.mxu0 0.0
    %1768 = vmatpush1.msra.mxu0 %v1495
    %1769 = vmatprep.subr.mxu0 0.0
    %1770 = vmatpush1.msra.mxu0 %v1494
    %1771 = vmatprep.subr.mxu0 0.0
    %1772 = vmatpush1.msra.mxu0 %v1493
    %1773 = vmatprep.subr.mxu0 0.0
    %1774 = vmatpush1.msra.mxu0 %v1492
    %1775 = vmatprep.subr.mxu0 0.0
    %1776 = vmatpush1.msra.mxu0 %v1491
    %1777 = vmatprep.subr.mxu0 0.0
    %1778 = vmatpush1.msra.mxu0 %v1490
    %1779 = vmatprep.subr.mxu0 0.0
    %1780 = vmatpush2.msra.mxu0 %v1521
    %1781 = vmatprep.subr.mxu0 0.0
    %1782 = vmatpush2.msra.mxu0 %v1520
    %1783 = vmatprep.subr.mxu0 0.0
    %1784 = vmatpush2.msra.mxu0 %v1519
    %1785 = vmatprep.subr.mxu0 0.0
    %1786 = vmatpush2.msra.mxu0 %v1518
    %1787 = vmatprep.subr.mxu0 0.0
    %1788 = vmatpush2.msra.mxu0 %v1517
    %1789 = vmatprep.subr.mxu0 0.0
    %1790 = vmatpush2.msra.mxu0 %v1516
    %1791 = vmatprep.subr.mxu0 0.0
    %1792 = vmatpush2.msra.mxu0 %v1515
    %1793 = vmatprep.subr.mxu0 0.0
    %1794 = vmatpush2.msra.mxu0 %v1514
    %1795 = vmatprep.subr.mxu0 0.0
    %1796 = vmatpush2.msra.mxu0 %v1513
    %1797 = vmatprep.subr.mxu0 0.0
    %1798 = vmatpush2.msra.mxu0 %v1512
    %1799 = vmatprep.subr.mxu0 0.0
    %1800 = vmatpush2.msra.mxu0 %v1511
    %1801 = vmatprep.subr.mxu0 0.0
    %1802 = vmatpush2.msra.mxu0 %v1510
    %1803 = vmatprep.subr.mxu0 0.0
    %1804 = vmatpush2.msra.mxu0 %v1509
    %1805 = vmatprep.subr.mxu0 0.0
    %1806 = vmatpush2.msra.mxu0 %v1508
    %1807 = vmatprep.subr.mxu0 0.0
    %1808 = vmatpush2.msra.mxu0 %v1507
    %1809 = vmatprep.subr.mxu0 0.0
    %1810 = vmatpush2.msra.mxu0 %v1506
    %1811 = vmatprep.mubr.f32.mxu0 %v854
    %1812 = vmatmul.mubr.f32.gmra.mxu0 %v852
    %v1813 = vpop.f32.mrf.mxu0
    %v1814 = vadd.f32 %v1589, %v1813
    %v1815 = vpop.f32.mrf.mxu0
    %1816 = vmatprep.mubr.f32.mxu0 %v858
    %1817 = vmatmul.mubr.f32.gmra.mxu0 %v856
    %v1818 = vpop.f32.mrf.mxu0
    %v1819 = vadd.f32 %v1594, %v1818
    %v1820 = vpop.f32.mrf.mxu0
    %1821 = vmatprep.mubr.f32.mxu0 %v864
    %1822 = vmatmul.mubr.f32.gmra.mxu0 %v862
    %v1823 = vpop.f32.mrf.mxu0
    %v1824 = vadd.f32 %v1599, %v1823
    %v1825 = vpop.f32.mrf.mxu0
    %1826 = vmatprep.mubr.f32.mxu0 %v868
    %1827 = vmatmul.mubr.f32.gmra.mxu0 %v866
    %v1828 = vpop.f32.mrf.mxu0
    %v1829 = vadd.f32 %v1604, %v1828
    %v1830 = vpop.f32.mrf.mxu0
    %1831 = vmatprep.mubr.f32.mxu0 %v874
    %1832 = vmatmul.mubr.f32.gmra.mxu0 %v872
    %v1833 = vpop.f32.mrf.mxu0
    %v1834 = vadd.f32 %v1609, %v1833
    %v1835 = vpop.f32.mrf.mxu0
    %1836 = vmatprep.mubr.f32.mxu0 %v878
    %1837 = vmatmul.mubr.f32.gmra.mxu0 %v876
    %v1838 = vpop.f32.mrf.mxu0
    %v1839 = vadd.f32 %v1614, %v1838
    %v1840 = vpop.f32.mrf.mxu0
    %1841 = vmatprep.mubr.f32.mxu0 %v884
    %1842 = vmatmul.mubr.f32.gmra.mxu0 %v882
    %v1843 = vpop.f32.mrf.mxu0
    %v1844 = vadd.f32 %v1619, %v1843
    %v1845 = vpop.f32.mrf.mxu0
    %1846 = vmatprep.mubr.f32.mxu0 %v888
    %1847 = vmatmul.mubr.f32.gmra.mxu0 %v886
    %v1848 = vpop.f32.mrf.mxu0
    %v1849 = vadd.f32 %v1624, %v1848
    %v1850 = vpop.f32.mrf.mxu0
    %1851 = vmatprep.mubr.f32.mxu0 %v894
    %1852 = vmatmul.mubr.f32.gmra.mxu0 %v892
    %v1853 = vpop.f32.mrf.mxu0
    %v1854 = vadd.f32 %v1629, %v1853
    %v1855 = vpop.f32.mrf.mxu0
    %1856 = vmatprep.mubr.f32.mxu0 %v898
    %1857 = vmatmul.mubr.f32.gmra.mxu0 %v896
    %v1858 = vpop.f32.mrf.mxu0
    %v1859 = vadd.f32 %v1634, %v1858
    %v1860 = vpop.f32.mrf.mxu0
    %1861 = vmatprep.mubr.f32.mxu0 %v904
    %1862 = vmatmul.mubr.f32.gmra.mxu0 %v902
    %v1863 = vpop.f32.mrf.mxu0
    %v1864 = vadd.f32 %v1639, %v1863
    %v1865 = vpop.f32.mrf.mxu0
    %1866 = vmatprep.mubr.f32.mxu0 %v908
    %1867 = vmatmul.mubr.f32.gmra.mxu0 %v906
    %v1868 = vpop.f32.mrf.mxu0
    %v1869 = vadd.f32 %v1644, %v1868
    %v1870 = vpop.f32.mrf.mxu0
    %1871 = vmatprep.mubr.f32.mxu0 %v914
    %1872 = vmatmul.mubr.f32.gmra.mxu0 %v912
    %v1873 = vpop.f32.mrf.mxu0
    %v1874 = vadd.f32 %v1649, %v1873
    %v1875 = vpop.f32.mrf.mxu0
    %1876 = vmatprep.mubr.f32.mxu0 %v918
    %1877 = vmatmul.mubr.f32.gmra.mxu0 %v916
    %v1878 = vpop.f32.mrf.mxu0
    %v1879 = vadd.f32 %v1654, %v1878
    %v1880 = vpop.f32.mrf.mxu0
    %1881 = vmatprep.mubr.f32.mxu0 %v924
    %1882 = vmatmul.mubr.f32.gmra.mxu0 %v922
    %v1883 = vpop.f32.mrf.mxu0
    %v1884 = vadd.f32 %v1659, %v1883
    %v1885 = vpop.f32.mrf.mxu0
    %1886 = vmatprep.mubr.f32.mxu0 %v928
    %1887 = vmatmul.mubr.f32.gmra.mxu0 %v926
    %v1888 = vpop.f32.mrf.mxu0
    %v1889 = vadd.f32 %v1664, %v1888
    %v1890 = vpop.f32.mrf.mxu0
    %1891 = vmatprep.mubr.f32.mxu0 %v934
    %1892 = vmatmul.mubr.f32.gmra.mxu0 %v932
    %v1893 = vpop.f32.mrf.mxu0
    %v1894 = vadd.f32 %v1669, %v1893
    %v1895 = vpop.f32.mrf.mxu0
    %1896 = vmatprep.mubr.f32.mxu0 %v938
    %1897 = vmatmul.mubr.f32.gmra.mxu0 %v936
    %v1898 = vpop.f32.mrf.mxu0
    %v1899 = vadd.f32 %v1674, %v1898
    %v1900 = vpop.f32.mrf.mxu0
    %1901 = vmatprep.mubr.f32.mxu0 %v944
    %1902 = vmatmul.mubr.f32.gmra.mxu0 %v942
    %v1903 = vpop.f32.mrf.mxu0
    %v1904 = vadd.f32 %v1679, %v1903
    %v1905 = vpop.f32.mrf.mxu0
    %1906 = vmatprep.mubr.f32.mxu0 %v948
    %1907 = vmatmul.mubr.f32.gmra.mxu0 %v946
    %v1908 = vpop.f32.mrf.mxu0
    %v1909 = vadd.f32 %v1684, %v1908
    %v1910 = vpop.f32.mrf.mxu0
    %1911 = vmatprep.mubr.f32.mxu0 %v954
    %1912 = vmatmul.mubr.f32.gmra.mxu0 %v952
    %v1913 = vpop.f32.mrf.mxu0
    %v1914 = vadd.f32 %v1689, %v1913
    %v1915 = vpop.f32.mrf.mxu0
    %1916 = vmatprep.mubr.f32.mxu0 %v958
    %1917 = vmatmul.mubr.f32.gmra.mxu0 %v956
    %v1918 = vpop.f32.mrf.mxu0
    %v1919 = vadd.f32 %v1694, %v1918
    %v1920 = vpop.f32.mrf.mxu0
    %1921 = vmatprep.mubr.f32.mxu0 %v964
    %1922 = vmatmul.mubr.f32.gmra.mxu0 %v962
    %v1923 = vpop.f32.mrf.mxu0
    %v1924 = vadd.f32 %v1699, %v1923
    %v1925 = vpop.f32.mrf.mxu0
    %1926 = vmatprep.mubr.f32.mxu0 %v968
    %1927 = vmatmul.mubr.f32.gmra.mxu0 %v966
    %v1928 = vpop.f32.mrf.mxu0
    %v1929 = vadd.f32 %v1704, %v1928
    %v1930 = vpop.f32.mrf.mxu0
    %1931 = vmatprep.mubr.f32.mxu0 %v974
    %1932 = vmatmul.mubr.f32.gmra.mxu0 %v972
    %v1933 = vpop.f32.mrf.mxu0
    %v1934 = vadd.f32 %v1709, %v1933
    %v1935 = vpop.f32.mrf.mxu0
    %1936 = vmatprep.mubr.f32.mxu0 %v978
    %1937 = vmatmul.mubr.f32.gmra.mxu0 %v976
    %v1938 = vpop.f32.mrf.mxu0
    %v1939 = vadd.f32 %v1714, %v1938
    %v1940 = vpop.f32.mrf.mxu0
    %1941 = vmatprep.mubr.f32.mxu0 %v984
    %1942 = vmatmul.mubr.f32.gmra.mxu0 %v982
    %v1943 = vpop.f32.mrf.mxu0
    %v1944 = vadd.f32 %v1719, %v1943
    %v1945 = vpop.f32.mrf.mxu0
    %1946 = vmatprep.mubr.f32.mxu0 %v988
    %1947 = vmatmul.mubr.f32.gmra.mxu0 %v986
    %v1948 = vpop.f32.mrf.mxu0
    %v1949 = vadd.f32 %v1724, %v1948
    %v1950 = vpop.f32.mrf.mxu0
    %1951 = vmatprep.mubr.f32.mxu0 %v994
    %1952 = vmatmul.mubr.f32.gmra.mxu0 %v992
    %v1953 = vpop.f32.mrf.mxu0
    %v1954 = vadd.f32 %v1729, %v1953
    %v1955 = vpop.f32.mrf.mxu0
    %1956 = vmatprep.mubr.f32.mxu0 %v998
    %1957 = vmatmul.mubr.f32.gmra.mxu0 %v996
    %v1958 = vpop.f32.mrf.mxu0
    %v1959 = vadd.f32 %v1734, %v1958
    %v1960 = vpop.f32.mrf.mxu0
    %1961 = vmatprep.mubr.f32.mxu0 %v1004
    %1962 = vmatmul.mubr.f32.gmra.mxu0 %v1002
    %v1963 = vpop.f32.mrf.mxu0
    %v1964 = vadd.f32 %v1739, %v1963
    %v1965 = vpop.f32.mrf.mxu0
    %1966 = vmatprep.mubr.f32.mxu0 %v1008
    %1967 = vmatmul.mubr.f32.gmra.mxu0 %v1006
    %v1968 = vpop.f32.mrf.mxu0
    %v1969 = vadd.f32 %v1744, %v1968
    %v1970 = vpop.f32.mrf.mxu0
    %1971 = vdwg.mxu0
    %vm1972 = vcmask 130048
    %1973 = vst.msk [vmem:[%s6] sm:$0xff] %vm1972, %v1814
    %1974 = vst.msk [vmem:[%s6 + $0x8] sm:$0xff] %vm1972, %v1819
    %1975 = vst.msk [vmem:[%s6 + $0x10] sm:$0xff] %vm1972, %v1824
    %1976 = vst.msk [vmem:[%s6 + $0x18] sm:$0xff] %vm1972, %v1829
    %1977 = vst.msk [vmem:[%s6 + $0x20] sm:$0xff] %vm1972, %v1834
    %1978 = vst.msk [vmem:[%s6 + $0x28] sm:$0xff] %vm1972, %v1839
    %1979 = vst.msk [vmem:[%s6 + $0x30] sm:$0xff] %vm1972, %v1844
    %1980 = vst.msk [vmem:[%s6 + $0x38] sm:$0xff] %vm1972, %v1849
    %1981 = vst.msk [vmem:[%s6 + $0x40] sm:$0xff] %vm1972, %v1854
    %1982 = vst.msk [vmem:[%s6 + $0x48] sm:$0xff] %vm1972, %v1859
    %1983 = vst.msk [vmem:[%s6 + $0x50] sm:$0xff] %vm1972, %v1864
    %1984 = vst.msk [vmem:[%s6 + $0x58] sm:$0xff] %vm1972, %v1869
    %1985 = vst.msk [vmem:[%s6 + $0x60] sm:$0xff] %vm1972, %v1874
    %1986 = vst.msk [vmem:[%s6 + $0x68] sm:$0xff] %vm1972, %v1879
    %1987 = vst.msk [vmem:[%s6 + $0x70] sm:$0xff] %vm1972, %v1884
    %1988 = vst.msk [vmem:[%s6 + $0x78] sm:$0xff] %vm1972, %v1889
    %1989 = vst.msk [vmem:[%s6 + $0x80] sm:$0xff] %vm1972, %v1894
    %1990 = vst.msk [vmem:[%s6 + $0x88] sm:$0xff] %vm1972, %v1899
    %1991 = vst.msk [vmem:[%s6 + $0x90] sm:$0xff] %vm1972, %v1904
    %1992 = vst.msk [vmem:[%s6 + $0x98] sm:$0xff] %vm1972, %v1909
    %1993 = vst.msk [vmem:[%s6 + $0xa0] sm:$0xff] %vm1972, %v1914
    %1994 = vst.msk [vmem:[%s6 + $0xa8] sm:$0xff] %vm1972, %v1919
    %1995 = vst.msk [vmem:[%s6 + $0xb0] sm:$0xff] %vm1972, %v1924
    %1996 = vst.msk [vmem:[%s6 + $0xb8] sm:$0xff] %vm1972, %v1929
    %1997 = vst.msk [vmem:[%s6 + $0xc0] sm:$0xff] %vm1972, %v1934
    %1998 = vst.msk [vmem:[%s6 + $0xc8] sm:$0xff] %vm1972, %v1939
    %1999 = vst.msk [vmem:[%s6 + $0xd0] sm:$0xff] %vm1972, %v1944
    %2000 = vst.msk [vmem:[%s6 + $0xd8] sm:$0xff] %vm1972, %v1949
    %2001 = vst.msk [vmem:[%s6 + $0xe0] sm:$0xff] %vm1972, %v1954
    %2002 = vst.msk [vmem:[%s6 + $0xe8] sm:$0xff] %vm1972, %v1959
    %2003 = vst.msk [vmem:[%s6 + $0xf0] sm:$0xff] %vm1972, %v1964
    %2004 = vst.msk [vmem:[%s6 + $0xf8] sm:$0xff] %vm1972, %v1969
    // Predicated region
    $region22: #{tpu_custom_call.1} parent=1 // pred_check
      _
    $region23: #{tpu_custom_call.1} parent=1 // pred_check_branch
      %2006 = sbr.rel (0) target = $region25
    $region24: #{tpu_custom_call.1} parent=1 // pred_region
      %s2008 = ssub.s32 8192, 8192
      %2009 = vsyncadd [#allocation3], %s2008
      %s2010 = sshll.u32 [#allocation2], 4
      %s2011 = int_to_ptr.vmem [resolvable:$true] %s2010
      %2016 = dma.vmem_to_hbm [thread:$0]  %s2011, 8192, %s5, [#allocation3], 256, 256, 16
    $region25: #{tpu_custom_call.1} parent=1 // pred_fallthru
      _
    // Predicated region
    $region26: #{tpu_custom_call.1} parent=1 // pred_check
      _
    $region27: #{tpu_custom_call.1} parent=1 // pred_check_branch
      %2018 = sbr.rel (0) target = $region29
    $region28: #{tpu_custom_call.1} parent=1 // pred_region
      _
    $region29: #{tpu_custom_call.1} parent=1 // pred_fallthru
      _
    // Predicated region
    $region30: #{tpu_custom_call.1} parent=1 // pred_check
      _
    $region31: #{tpu_custom_call.1} parent=1 // pred_check_branch
      %2020 = sbr.rel (0) target = $region33
    $region32: #{tpu_custom_call.1} parent=1 // pred_region
      %2021 = dma.done [#allocation3], 8192
    $region33: #{tpu_custom_call.1} parent=1 // pred_fallthru
      _
    // Predicated region
    $region34: #{tpu_custom_call.1} parent=1 // pred_check
      _
    $region35: #{tpu_custom_call.1} parent=1 // pred_check_branch
      %2023 = sbr.rel (0) target = $region37
    $region36: #{tpu_custom_call.1} parent=1 // pred_region
      _
    $region37: #{tpu_custom_call.1} parent=1 // pred_fallthru
      _
    %2024 = vsyncpa [#allocation3], 1

</llo_original>
